<compile_context>
chip_gen: v5e
topology: v5e:2x2
jax: 0.10.0
libtpu: 0.0.40
codegen_flags: <defaults>
</compile_context>

<pallas_src>
import functools
import math

import jax
import jax.numpy as jnp
from jax.experimental import pallas as pl
from jax.experimental.pallas import tpu as pltpu


# ---------------------------------------------------------------------------
# small math helpers (all lower to plain Mosaic-supported ops)
# ---------------------------------------------------------------------------
def _mm(a, w):
    """a: (M, K), w: (K, N) -> (M, N), f32 accumulation."""
    return jax.lax.dot_general(
        a, w, (((1,), (0,)), ((), ())), preferred_element_type=jnp.float32
    )


def _bmm_nt(a, b):
    """a: (B, M, K), b: (B, N, K) -> (B, M, N)  ('bqd,bkd->bqk')."""
    return jax.lax.dot_general(
        a, b, (((2,), (2,)), ((0,), (0,))), preferred_element_type=jnp.float32
    )


def _bmm_nn(a, b):
    """a: (B, M, K), b: (B, K, N) -> (B, M, N)  ('bqk,bkd->bqd')."""
    return jax.lax.dot_general(
        a, b, (((2,), (1,)), ((0,), (0,))), preferred_element_type=jnp.float32
    )


def _layer_norm(x, gamma, beta, eps=1e-5):
    """x: (M, D), gamma/beta: (1, D). Biased variance, matches torch.nn.LayerNorm."""
    mean = jnp.mean(x, axis=-1, keepdims=True)
    xc = x - mean
    var = jnp.mean(xc * xc, axis=-1, keepdims=True)
    inv = jax.lax.rsqrt(var + eps)
    return xc * inv * gamma + beta


# ---------------------------------------------------------------------------
# fused Pallas kernel: one (batch_tile, layer) grid step
# ---------------------------------------------------------------------------
def cfa_stack_kernel(
    tgt_ref, mem_ref,                       # (TB, L, D), (TB, S, D)
    wq_ref, bq_ref,                         # (1, D, D),  (1, 1, D)
    wkv_ref, bkv_ref,                       # (1, D, 2D), (1, 1, 2D)
    wo_ref, ob_ref,                         # (1, D, D),  (1, 1, D)
    w1_ref, b1_ref,                         # (1, D, F),  (1, 1, F)
    w2_ref, b2_ref,                         # (1, F, D),  (1, 1, D)
    g1_ref, be1_ref, g2_ref, be2_ref,       # (1, 1, D) each
    gf_ref, bf_ref,                         # (1, D) final decoder norm
    out_ref, attn_ref,                      # (TB, L, D), (TB, L, S)
    x_scr,                                  # VMEM (TB*L, D) f32 — resident activation
    *, nhead,
):
    TB, L, D = tgt_ref.shape
    S = mem_ref.shape[1]
    H = nhead
    Dh = D // H
    M = TB * L
    scale = 1.0 / math.sqrt(Dh)
    bf16 = jnp.bfloat16

    l_idx = pl.program_id(1)
    n_layers = pl.num_programs(1)

    # Activation becomes resident at the start of each batch tile's layer sweep.
    @pl.when(l_idx == 0)
    def _():
        x_scr[...] = tgt_ref[...].reshape(M, D).astype(jnp.float32)

    x = x_scr[...]                                   # (M, D) f32
    m = mem_ref[...].reshape(TB * S, D)              # (TB*S, D)

    # ---- multi-head cross attention --------------------------------------
    # Full-width, lane-dense projections (single MXU push each, no H-way copies).
    q2 = (_mm(x.astype(bf16), wq_ref[0]) + bq_ref[0]) * scale     # (M, D) f32
    kv = _mm(m.astype(bf16), wkv_ref[0]) + bkv_ref[0]             # (TB*S, 2D) f32

    # Re-split heads (and batch) only for the batched score / context dots.
    q_h, k_h, v_h = [], [], []
    for b in range(TB):
        qb = q2[b * L:(b + 1) * L]
        kvb = kv[b * S:(b + 1) * S]
        for h in range(H):
            q_h.append(qb[:, h * Dh:(h + 1) * Dh])
            k_h.append(kvb[:, h * Dh:(h + 1) * Dh])
            v_h.append(kvb[:, D + h * Dh:D + (h + 1) * Dh])
    q3 = jnp.stack(q_h, axis=0).astype(bf16)         # (TB*H, L, Dh)
    k3 = jnp.stack(k_h, axis=0).astype(bf16)         # (TB*H, S, Dh)
    v3 = jnp.stack(v_h, axis=0).astype(bf16)         # (TB*H, S, Dh)

    s = _bmm_nt(q3, k3)                              # (TB*H, L, S) f32
    s = s - jnp.max(s, axis=-1, keepdims=True)
    p = jnp.exp(s)
    p = p / jnp.sum(p, axis=-1, keepdims=True)       # exact softmax (f32)

    ctx = _bmm_nn(p.astype(bf16), v3)                # (TB*H, L, Dh) f32

    # Merge heads -> (M, D), then ONE fused out-projection (contraction depth D).
    ctx2 = jnp.concatenate(
        [jnp.concatenate([ctx[b * H + h] for h in range(H)], axis=-1)
         for b in range(TB)], axis=0)                # (M, D)
    tgt2 = _mm(ctx2.astype(bf16), wo_ref[0]) + ob_ref[0]          # (M, D)

    # ---- residual + norm1 --------------------------------------------------
    x = _layer_norm(x + tgt2, g1_ref[0], be1_ref[0])

    # ---- FFN (relu) + residual + norm2 -------------------------------------
    h1 = jnp.maximum(_mm(x.astype(bf16), w1_ref[0]) + b1_ref[0], 0.0)   # (M, F)
    ff = _mm(h1.astype(bf16), w2_ref[0]) + b2_ref[0]                    # (M, D)
    x = _layer_norm(x + ff, g2_ref[0], be2_ref[0])

    x_scr[...] = x

    # Only the last layer produces the outputs (output blocks are resident
    # across the layer axis and written back to HBM when the batch advances).
    @pl.when(l_idx == n_layers - 1)
    def _():
        y = _layer_norm(x, gf_ref[...], bf_ref[...])
        out_ref[...] = y.reshape(TB, L, D).astype(out_ref.dtype)
        attn = jnp.stack(
            [jnp.mean(p[b * H:(b + 1) * H], axis=0) for b in range(TB)], axis=0)
        attn_ref[...] = attn.astype(attn_ref.dtype)


# ---------------------------------------------------------------------------
# host-side weight packing: stack layers, store weights bf16 / input-major
# (output dim last => lane-dense minor dims at production sizes)
# ---------------------------------------------------------------------------
_PACK_ORDER = ("wq", "bq", "wkv", "bkv", "wo", "ob",
               "w1", "b1", "w2", "b2", "g1", "be1", "g2", "be2")
_WEIGHT_NAMES = {"wq", "wkv", "wo", "w1", "w2"}       # stored bf16


def pack_cfa_params(layer_params, final_norm):
    D = layer_params[0]["out_w"].shape[0]
    acc = {k: [] for k in _PACK_ORDER}
    for p in layer_params:
        in_w = p["in_w"]                  # (3D, D)
        in_b = p["in_b"][0]               # (3D,)
        acc["wq"].append(in_w[0:D].T)                                     # (D, D)
        acc["bq"].append(in_b[0:D].reshape(1, D))
        acc["wkv"].append(jnp.concatenate([in_w[D:2 * D].T,
                                           in_w[2 * D:3 * D].T], axis=1))  # (D, 2D)
        acc["bkv"].append(in_b[D:3 * D].reshape(1, 2 * D))
        acc["wo"].append(p["out_w"].T)                                    # (D, D)
        acc["ob"].append(p["out_b"])                                      # (1, D)
        acc["w1"].append(p["w1"].T)                                       # (D, F)
        acc["b1"].append(p["b1"])                                         # (1, F)
        acc["w2"].append(p["w2"].T)                                       # (F, D)
        acc["b2"].append(p["b2"])                                         # (1, D)
        acc["g1"].append(p["g1"]); acc["be1"].append(p["be1"])
        acc["g2"].append(p["g2"]); acc["be2"].append(p["be2"])
    packed = tuple(
        jnp.stack(acc[k]).astype(jnp.bfloat16 if k in _WEIGHT_NAMES else jnp.float32)
        for k in _PACK_ORDER)
    packed = packed + (final_norm["g"].astype(jnp.float32),
                       final_norm["b"].astype(jnp.float32))
    return packed


# ---------------------------------------------------------------------------
# pallas_call wrapper — grid = (batch, layer); per-layer weights streamed
# ---------------------------------------------------------------------------
def run_cfa(tgt, mem, packed, nhead, batch_tile=1):
    """tgt: (N, L, D) f32, mem: (N, S, D) f32 -> (out (N,L,D), attn (N,L,S))."""
    N, L, D = tgt.shape
    S = mem.shape[1]
    TB = batch_tile
    assert N % TB == 0, "batch_tile must divide batch size"
    NL = packed[0].shape[0]

    def batch_idx(b, l):
        return (b, 0, 0)

    def layer_idx(b, l):        # per-layer weights: streamed/double-buffered
        return (l, 0, 0)

    def const_idx2(b, l):       # final norm params: fetched once (tiny)
        return (0, 0)

    per_layer_specs = [pl.BlockSpec((1,) + tuple(w.shape[1:]), layer_idx)
                       for w in packed[:-2]]
    final_norm_specs = [pl.BlockSpec(tuple(packed[-2].shape), const_idx2),
                        pl.BlockSpec(tuple(packed[-1].shape), const_idx2)]

    in_specs = ([pl.BlockSpec((TB, L, D), batch_idx),
                 pl.BlockSpec((TB, S, D), batch_idx)]
                + per_layer_specs + final_norm_specs)

    out_specs = [pl.BlockSpec((TB, L, D), batch_idx),
                 pl.BlockSpec((TB, L, S), batch_idx)]
    out_shape = (jax.ShapeDtypeStruct((N, L, D), jnp.float32),
                 jax.ShapeDtypeStruct((N, L, S), jnp.float32))

    kernel = functools.partial(cfa_stack_kernel, nhead=nhead)

    return pl.pallas_call(
        kernel,
        out_shape=out_shape,
        grid_spec=pltpu.PrefetchScalarGridSpec(
            num_scalar_prefetch=0,
            grid=(N // TB, NL),
            in_specs=in_specs,
            out_specs=out_specs,
            scratch_shapes=[pltpu.VMEM((TB * L, D), jnp.float32)],
        ),
        compiler_params=pltpu.CompilerParams(
            # batch -> both TensorCores on v7x; layer axis carries the
            # resident-activation / resident-output dependency.
            dimension_semantics=("parallel", "arbitrary"),
            vmem_limit_bytes=48 * 1024 * 1024,
        ),
    )(tgt, mem, *packed)


# ---------------------------------------------------------------------------
# parameter construction (xavier-uniform for dim>1 params, zeros for biases,
# ones/zeros for LayerNorm — mirrors CFA._reset_parameters, eval mode)
# ---------------------------------------------------------------------------
def _xavier_uniform(key, shape):
    fan_out, fan_in = shape
    bound = math.sqrt(6.0 / (fan_in + fan_out))
    return jax.random.uniform(key, shape, jnp.float32, -bound, bound)


def init_cfa_params(key, d_model, nhead, num_layers, dim_ff):
    layers = []
    for _ in range(num_layers):
        key, k1, k2, k3, k4 = jax.random.split(key, 5)
        layers.append({
            "in_w": _xavier_uniform(k1, (3 * d_model, d_model)),
            "in_b": jnp.zeros((1, 3 * d_model), jnp.float32),
            "out_w": _xavier_uniform(k2, (d_model, d_model)),
            "out_b": jnp.zeros((1, d_model), jnp.float32),
            "w1": _xavier_uniform(k3, (dim_ff, d_model)),
            "b1": jnp.zeros((1, dim_ff), jnp.float32),
            "w2": _xavier_uniform(k4, (d_model, dim_ff)),
            "b2": jnp.zeros((1, d_model), jnp.float32),
            "g1": jnp.ones((1, d_model), jnp.float32),
            "be1": jnp.zeros((1, d_model), jnp.float32),
            "g2": jnp.ones((1, d_model), jnp.float32),
            "be2": jnp.zeros((1, d_model), jnp.float32),
        })
    final_norm = {
        "g": jnp.ones((1, d_model), jnp.float32),
        "b": jnp.zeros((1, d_model), jnp.float32),
    }
    return layers, final_norm


# ---------------------------------------------------------------------------
# CFA forward (matches CFA.forward(src_temp, src_search) -> (hs, weight))
# ---------------------------------------------------------------------------
def cfa_forward(src_temp, src_search, layer_params, final_norm, nhead,
                batch_tile=1):
    # src_temp: (L, N, D), src_search: (S, N, D) — PyTorch (seq, batch, embed)
    tgt = jnp.transpose(src_temp, (1, 0, 2)).astype(jnp.float32)     # (N, L, D)
    mem = jnp.transpose(src_search, (1, 0, 2)).astype(jnp.float32)   # (N, S, D)

    packed = pack_cfa_params(layer_params, final_norm)
    out, attn = run_cfa(tgt, mem, packed, nhead, batch_tile=batch_tile)

    hs = jnp.transpose(out, (1, 0, 2))   # back to (L, N, D)
    # attn: (N, L, S) — last layer's head-averaged attention weights,
    # same as nn.MultiheadAttention with average_attn_weights=True.
    return hs, attn


# ---------------------------------------------------------------------------
# demo
# ---------------------------------------------------------------------------
if __name__ == "__main__":
    d_model = 32
    nhead = 4
    num_layers = 2
    dim_ff = 64
    L, S, N = 8, 16, 2   # target seq, memory seq, batch

    key = jax.random.PRNGKey(0)
    key, kt, ks = jax.random.split(key, 3)
    src_temp = jax.random.normal(kt, (L, N, d_model), jnp.float32)
    src_search = jax.random.normal(ks, (S, N, d_model), jnp.float32)

    layer_params, final_norm = init_cfa_params(key, d_model, nhead, num_layers,
                                               dim_ff)

    hs, weight = cfa_forward(src_temp, src_search, layer_params, final_norm, nhead)
    hs = jax.block_until_ready(hs)
    weight = jax.block_until_ready(weight)

    assert hs.shape == (L, N, d_model)
    assert weight.shape == (N, L, S)
    assert bool(jnp.all(jnp.isfinite(hs)))
    assert bool(jnp.all(jnp.isfinite(weight)))
    # exact softmax: attention rows sum to 1 to f32 precision
    assert bool(jnp.allclose(jnp.sum(weight, axis=-1), 1.0, atol=1e-4))

    print("KERNEL_OK")
</pallas_src>

<mosaic_0001>
module attributes {stable_mosaic.version = 11 : i64} {
  func.func @cfa_stack_kernel(%arg0: i32, %arg1: i32, %arg2: memref<1x8x32xf32, #tpu.memory_space<vmem>>, %arg3: memref<1x16x32xf32, #tpu.memory_space<vmem>>, %arg4: memref<1x32x32xbf16, #tpu.memory_space<vmem>>, %arg5: memref<1x1x32xf32, #tpu.memory_space<vmem>>, %arg6: memref<1x32x64xbf16, #tpu.memory_space<vmem>>, %arg7: memref<1x1x64xf32, #tpu.memory_space<vmem>>, %arg8: memref<1x32x32xbf16, #tpu.memory_space<vmem>>, %arg9: memref<1x1x32xf32, #tpu.memory_space<vmem>>, %arg10: memref<1x32x64xbf16, #tpu.memory_space<vmem>>, %arg11: memref<1x1x64xf32, #tpu.memory_space<vmem>>, %arg12: memref<1x64x32xbf16, #tpu.memory_space<vmem>>, %arg13: memref<1x1x32xf32, #tpu.memory_space<vmem>>, %arg14: memref<1x1x32xf32, #tpu.memory_space<vmem>>, %arg15: memref<1x1x32xf32, #tpu.memory_space<vmem>>, %arg16: memref<1x1x32xf32, #tpu.memory_space<vmem>>, %arg17: memref<1x1x32xf32, #tpu.memory_space<vmem>>, %arg18: memref<1x32xf32, #tpu.memory_space<vmem>>, %arg19: memref<1x32xf32, #tpu.memory_space<vmem>>, %arg20: memref<1x8x32xf32, #tpu.memory_space<vmem>>, %arg21: memref<1x8x16xf32, #tpu.memory_space<vmem>>, %arg22: memref<8x32xf32, #tpu.memory_space<vmem>>) attributes {dimension_semantics = [#tpu.dimension_semantics<parallel>, #tpu.dimension_semantics<arbitrary>], iteration_bounds = array<i64: 2, 2>, scalar_prefetch = 0 : i64, scratch_operands = 1 : i64, tpu.core_type = #tpu.core_type<tc>, window_params = [{transform_indices = @transform_0, window_bounds = array<i64: 1, 8, 32>}, {transform_indices = @transform_1, window_bounds = array<i64: 1, 16, 32>}, {transform_indices = @transform_2, window_bounds = array<i64: 1, 32, 32>}, {transform_indices = @transform_3, window_bounds = array<i64: 1, 1, 32>}, {transform_indices = @transform_4, window_bounds = array<i64: 1, 32, 64>}, {transform_indices = @transform_5, window_bounds = array<i64: 1, 1, 64>}, {transform_indices = @transform_6, window_bounds = array<i64: 1, 32, 32>}, {transform_indices = @transform_7, window_bounds = array<i64: 1, 1, 32>}, {transform_indices = @transform_8, window_bounds = array<i64: 1, 32, 64>}, {transform_indices = @transform_9, window_bounds = array<i64: 1, 1, 64>}, {transform_indices = @transform_10, window_bounds = array<i64: 1, 64, 32>}, {transform_indices = @transform_11, window_bounds = array<i64: 1, 1, 32>}, {transform_indices = @transform_12, window_bounds = array<i64: 1, 1, 32>}, {transform_indices = @transform_13, window_bounds = array<i64: 1, 1, 32>}, {transform_indices = @transform_14, window_bounds = array<i64: 1, 1, 32>}, {transform_indices = @transform_15, window_bounds = array<i64: 1, 1, 32>}, {pipeline_mode = #tpu.pipeline_mode<synchronous>, transform_indices = @transform_16, window_bounds = array<i64: 1, 32>}, {pipeline_mode = #tpu.pipeline_mode<synchronous>, transform_indices = @transform_17, window_bounds = array<i64: 1, 32>}, {transform_indices = @transform_18, window_bounds = array<i64: 1, 8, 32>}, {transform_indices = @transform_19, window_bounds = array<i64: 1, 8, 16>}]} {
    %c0_i32 = arith.constant 0 : i32
    %0 = arith.cmpi eq, %arg1, %c0_i32 : i32
    %1 = arith.extui %0 : i1 to i32
    %c0_i32_0 = arith.constant 0 : i32
    %2 = arith.cmpi ne, %1, %c0_i32_0 : i32
    scf.if %2 {
      %c0_70 = arith.constant 0 : index
      %c0_71 = arith.constant 0 : index
      %c0_72 = arith.constant 0 : index
      %155 = vector.load %arg2[%c0_70, %c0_71, %c0_72] : memref<1x8x32xf32, #tpu.memory_space<vmem>>, vector<1x8x32xf32>
      %156 = vector.shape_cast %155 : vector<1x8x32xf32> to vector<8x32xf32>
      %c0_73 = arith.constant 0 : index
      %c0_74 = arith.constant 0 : index
      %157 = vector.load %arg22[%c0_73, %c0_74] : memref<8x32xf32, #tpu.memory_space<vmem>>, vector<8x32xf32>
      tpu.vector_store %arg22[%c0_73, %c0_74], %156 {strides = array<i32>} : memref<8x32xf32, #tpu.memory_space<vmem>>, vector<8x32xf32>,
    } else {
    }
    %c0 = arith.constant 0 : index
    %c0_1 = arith.constant 0 : index
    %3 = vector.load %arg22[%c0, %c0_1] : memref<8x32xf32, #tpu.memory_space<vmem>>, vector<8x32xf32>
    %c0_2 = arith.constant 0 : index
    %c0_3 = arith.constant 0 : index
    %c0_4 = arith.constant 0 : index
    %4 = vector.load %arg3[%c0_2, %c0_3, %c0_4] : memref<1x16x32xf32, #tpu.memory_space<vmem>>, vector<1x16x32xf32>
    %5 = vector.shape_cast %4 : vector<1x16x32xf32> to vector<16x32xf32>
    %6 = arith.truncf %3 : vector<8x32xf32> to vector<8x32xbf16>
    %c0_5 = arith.constant 0 : index
    %c0_6 = arith.constant 0 : index
    %c0_7 = arith.constant 0 : index
    %7 = vector.load %arg4[%c0_5, %c0_6, %c0_7] : memref<1x32x32xbf16, #tpu.memory_space<vmem>>, vector<1x32x32xbf16>
    %8 = vector.shape_cast %7 : vector<1x32x32xbf16> to vector<32x32xbf16>
    %cst = arith.constant dense<0.000000e+00> : vector<8x32xf32>
    %9 = tpu.matmul %6, %8, %cst {dimension_numbers = #tpu.dot_dimension_numbers<[1], [0], [0], [1], [0, 0, 1, 1], [], []>} : vector<8x32xbf16>, vector<32x32xbf16>, vector<8x32xf32> -> vector<8x32xf32>
    %c0_8 = arith.constant 0 : index
    %c0_9 = arith.constant 0 : index
    %c0_10 = arith.constant 0 : index
    %10 = vector.load %arg5[%c0_8, %c0_9, %c0_10] : memref<1x1x32xf32, #tpu.memory_space<vmem>>, vector<1x1x32xf32>
    %11 = vector.shape_cast %10 : vector<1x1x32xf32> to vector<1x32xf32>
    %12 = vector.broadcast %11 : vector<1x32xf32> to vector<8x32xf32>
    %13 = arith.addf %9, %12 : vector<8x32xf32>
    %cst_11 = arith.constant 0.353553385 : f32
    %14 = vector.broadcast %cst_11 : f32 to vector<8x32xf32>
    %15 = arith.mulf %13, %14 : vector<8x32xf32>
    %16 = arith.truncf %5 : vector<16x32xf32> to vector<16x32xbf16>
    %c0_12 = arith.constant 0 : index
    %c0_13 = arith.constant 0 : index
    %c0_14 = arith.constant 0 : index
    %17 = vector.load %arg6[%c0_12, %c0_13, %c0_14] : memref<1x32x64xbf16, #tpu.memory_space<vmem>>, vector<1x32x64xbf16>
    %18 = vector.shape_cast %17 : vector<1x32x64xbf16> to vector<32x64xbf16>
    %cst_15 = arith.constant dense<0.000000e+00> : vector<16x64xf32>
    %19 = tpu.matmul %16, %18, %cst_15 {dimension_numbers = #tpu.dot_dimension_numbers<[1], [0], [0], [1], [0, 0, 1, 1], [], []>} : vector<16x32xbf16>, vector<32x64xbf16>, vector<16x64xf32> -> vector<16x64xf32>
    %c0_16 = arith.constant 0 : index
    %c0_17 = arith.constant 0 : index
    %c0_18 = arith.constant 0 : index
    %20 = vector.load %arg7[%c0_16, %c0_17, %c0_18] : memref<1x1x64xf32, #tpu.memory_space<vmem>>, vector<1x1x64xf32>
    %21 = vector.shape_cast %20 : vector<1x1x64xf32> to vector<1x64xf32>
    %22 = vector.broadcast %21 : vector<1x64xf32> to vector<16x64xf32>
    %23 = arith.addf %19, %22 : vector<16x64xf32>
    %24 = vector.extract_strided_slice %15 {offsets = [0, 0], sizes = [8, 8], strides = [1, 1]} : vector<8x32xf32> to vector<8x8xf32>
    %25 = vector.extract_strided_slice %23 {offsets = [0, 0], sizes = [16, 8], strides = [1, 1]} : vector<16x64xf32> to vector<16x8xf32>
    %26 = vector.extract_strided_slice %23 {offsets = [0, 32], sizes = [16, 8], strides = [1, 1]} : vector<16x64xf32> to vector<16x8xf32>
    %27 = vector.extract_strided_slice %15 {offsets = [0, 8], sizes = [8, 8], strides = [1, 1]} : vector<8x32xf32> to vector<8x8xf32>
    %28 = vector.extract_strided_slice %23 {offsets = [0, 8], sizes = [16, 8], strides = [1, 1]} : vector<16x64xf32> to vector<16x8xf32>
    %29 = vector.extract_strided_slice %23 {offsets = [0, 40], sizes = [16, 8], strides = [1, 1]} : vector<16x64xf32> to vector<16x8xf32>
    %30 = vector.extract_strided_slice %15 {offsets = [0, 16], sizes = [8, 8], strides = [1, 1]} : vector<8x32xf32> to vector<8x8xf32>
    %31 = vector.extract_strided_slice %23 {offsets = [0, 16], sizes = [16, 8], strides = [1, 1]} : vector<16x64xf32> to vector<16x8xf32>
    %32 = vector.extract_strided_slice %23 {offsets = [0, 48], sizes = [16, 8], strides = [1, 1]} : vector<16x64xf32> to vector<16x8xf32>
    %33 = vector.extract_strided_slice %15 {offsets = [0, 24], sizes = [8, 8], strides = [1, 1]} : vector<8x32xf32> to vector<8x8xf32>
    %34 = vector.extract_strided_slice %23 {offsets = [0, 24], sizes = [16, 8], strides = [1, 1]} : vector<16x64xf32> to vector<16x8xf32>
    %35 = vector.extract_strided_slice %23 {offsets = [0, 56], sizes = [16, 8], strides = [1, 1]} : vector<16x64xf32> to vector<16x8xf32>
    %36 = vector.shape_cast %24 : vector<8x8xf32> to vector<1x8x8xf32>
    %37 = vector.shape_cast %27 : vector<8x8xf32> to vector<1x8x8xf32>
    %38 = vector.shape_cast %30 : vector<8x8xf32> to vector<1x8x8xf32>
    %39 = vector.shape_cast %33 : vector<8x8xf32> to vector<1x8x8xf32>
    %40 = tpu.concatenate %36, %37, %38, %39 in 0 : vector<1x8x8xf32>, vector<1x8x8xf32>, vector<1x8x8xf32>, vector<1x8x8xf32> -> vector<4x8x8xf32>
    %41 = arith.truncf %40 : vector<4x8x8xf32> to vector<4x8x8xbf16>
    %42 = vector.shape_cast %25 : vector<16x8xf32> to vector<1x16x8xf32>
    %43 = vector.shape_cast %28 : vector<16x8xf32> to vector<1x16x8xf32>
    %44 = vector.shape_cast %31 : vector<16x8xf32> to vector<1x16x8xf32>
    %45 = vector.shape_cast %34 : vector<16x8xf32> to vector<1x16x8xf32>
    %46 = tpu.concatenate %42, %43, %44, %45 in 0 : vector<1x16x8xf32>, vector<1x16x8xf32>, vector<1x16x8xf32>, vector<1x16x8xf32> -> vector<4x16x8xf32>
    %47 = arith.truncf %46 : vector<4x16x8xf32> to vector<4x16x8xbf16>
    %48 = vector.shape_cast %26 : vector<16x8xf32> to vector<1x16x8xf32>
    %49 = vector.shape_cast %29 : vector<16x8xf32> to vector<1x16x8xf32>
    %50 = vector.shape_cast %32 : vector<16x8xf32> to vector<1x16x8xf32>
    %51 = vector.shape_cast %35 : vector<16x8xf32> to vector<1x16x8xf32>
    %52 = tpu.concatenate %48, %49, %50, %51 in 0 : vector<1x16x8xf32>, vector<1x16x8xf32>, vector<1x16x8xf32>, vector<1x16x8xf32> -> vector<4x16x8xf32>
    %53 = arith.truncf %52 : vector<4x16x8xf32> to vector<4x16x8xbf16>
    %cst_19 = arith.constant dense<0.000000e+00> : vector<4x8x16xf32>
    %54 = tpu.matmul %41, %47, %cst_19 {dimension_numbers = #tpu.dot_dimension_numbers<[2], [2], [1], [1], [0, 0, 0, 1, 1, 1], [0], [0]>} : vector<4x8x8xbf16>, vector<4x16x8xbf16>, vector<4x8x16xf32> -> vector<4x8x16xf32>
    %cst_20 = arith.constant dense<0xFF800000> : vector<4x8xf32>
    %55 = vector.multi_reduction <maximumf>, %54, %cst_20 [2] : vector<4x8x16xf32> to vector<4x8xf32>
    %56 = vector.shape_cast %55 : vector<4x8xf32> to vector<4x8x1xf32>
    %57 = vector.broadcast %56 : vector<4x8x1xf32> to vector<4x8x16xf32>
    %58 = arith.subf %54, %57 : vector<4x8x16xf32>
    %59 = math.exp %58 : vector<4x8x16xf32>
    %cst_21 = arith.constant dense<0.000000e+00> : vector<4x8xf32>
    %60 = vector.multi_reduction <add>, %59, %cst_21 [2] : vector<4x8x16xf32> to vector<4x8xf32>
    %61 = vector.shape_cast %60 : vector<4x8xf32> to vector<4x8x1xf32>
    %62 = vector.broadcast %61 : vector<4x8x1xf32> to vector<4x8x16xf32>
    %63 = arith.divf %59, %62 : vector<4x8x16xf32>
    %64 = arith.truncf %63 : vector<4x8x16xf32> to vector<4x8x16xbf16>
    %cst_22 = arith.constant dense<0.000000e+00> : vector<4x8x8xf32>
    %65 = tpu.matmul %64, %53, %cst_22 {dimension_numbers = #tpu.dot_dimension_numbers<[2], [1], [1], [2], [0, 0, 0, 1, 1, 2], [0], [0]>} : vector<4x8x16xbf16>, vector<4x16x8xbf16>, vector<4x8x8xf32> -> vector<4x8x8xf32>
    %66 = vector.extract_strided_slice %65 {offsets = [0, 0, 0], sizes = [1, 8, 8], strides = [1, 1, 1]} : vector<4x8x8xf32> to vector<1x8x8xf32>
    %67 = vector.shape_cast %66 : vector<1x8x8xf32> to vector<8x8xf32>
    %68 = vector.extract_strided_slice %65 {offsets = [1, 0, 0], sizes = [1, 8, 8], strides = [1, 1, 1]} : vector<4x8x8xf32> to vector<1x8x8xf32>
    %69 = vector.shape_cast %68 : vector<1x8x8xf32> to vector<8x8xf32>
    %70 = vector.extract_strided_slice %65 {offsets = [2, 0, 0], sizes = [1, 8, 8], strides = [1, 1, 1]} : vector<4x8x8xf32> to vector<1x8x8xf32>
    %71 = vector.shape_cast %70 : vector<1x8x8xf32> to vector<8x8xf32>
    %72 = vector.extract_strided_slice %65 {offsets = [3, 0, 0], sizes = [1, 8, 8], strides = [1, 1, 1]} : vector<4x8x8xf32> to vector<1x8x8xf32>
    %73 = vector.shape_cast %72 : vector<1x8x8xf32> to vector<8x8xf32>
    %74 = tpu.concatenate %67, %69, %71, %73 in 1 : vector<8x8xf32>, vector<8x8xf32>, vector<8x8xf32>, vector<8x8xf32> -> vector<8x32xf32>
    %75 = arith.truncf %74 : vector<8x32xf32> to vector<8x32xbf16>
    %c0_23 = arith.constant 0 : index
    %c0_24 = arith.constant 0 : index
    %c0_25 = arith.constant 0 : index
    %76 = vector.load %arg8[%c0_23, %c0_24, %c0_25] : memref<1x32x32xbf16, #tpu.memory_space<vmem>>, vector<1x32x32xbf16>
    %77 = vector.shape_cast %76 : vector<1x32x32xbf16> to vector<32x32xbf16>
    %cst_26 = arith.constant dense<0.000000e+00> : vector<8x32xf32>
    %78 = tpu.matmul %75, %77, %cst_26 {dimension_numbers = #tpu.dot_dimension_numbers<[1], [0], [0], [1], [0, 0, 1, 1], [], []>} : vector<8x32xbf16>, vector<32x32xbf16>, vector<8x32xf32> -> vector<8x32xf32>
    %c0_27 = arith.constant 0 : index
    %c0_28 = arith.constant 0 : index
    %c0_29 = arith.constant 0 : index
    %79 = vector.load %arg9[%c0_27, %c0_28, %c0_29] : memref<1x1x32xf32, #tpu.memory_space<vmem>>, vector<1x1x32xf32>
    %80 = vector.shape_cast %79 : vector<1x1x32xf32> to vector<1x32xf32>
    %81 = vector.broadcast %80 : vector<1x32xf32> to vector<8x32xf32>
    %82 = arith.addf %78, %81 : vector<8x32xf32>
    %83 = arith.addf %3, %82 : vector<8x32xf32>
    %c0_30 = arith.constant 0 : index
    %c0_31 = arith.constant 0 : index
    %c0_32 = arith.constant 0 : index
    %84 = vector.load %arg14[%c0_30, %c0_31, %c0_32] : memref<1x1x32xf32, #tpu.memory_space<vmem>>, vector<1x1x32xf32>
    %85 = vector.shape_cast %84 : vector<1x1x32xf32> to vector<1x32xf32>
    %c0_33 = arith.constant 0 : index
    %c0_34 = arith.constant 0 : index
    %c0_35 = arith.constant 0 : index
    %86 = vector.load %arg15[%c0_33, %c0_34, %c0_35] : memref<1x1x32xf32, #tpu.memory_space<vmem>>, vector<1x1x32xf32>
    %87 = vector.shape_cast %86 : vector<1x1x32xf32> to vector<1x32xf32>
    %cst_36 = arith.constant dense<0.000000e+00> : vector<8xf32>
    %88 = vector.multi_reduction <add>, %83, %cst_36 [1] : vector<8x32xf32> to vector<8xf32>
    %89 = vector.shape_cast %88 : vector<8xf32> to vector<8x1xf32>
    %cst_37 = arith.constant 3.200000e+01 : f32
    %90 = vector.broadcast %cst_37 : f32 to vector<8x1xf32>
    %91 = arith.divf %89, %90 : vector<8x1xf32>
    %92 = vector.broadcast %91 : vector<8x1xf32> to vector<8x32xf32>
    %93 = arith.subf %83, %92 : vector<8x32xf32>
    %94 = arith.mulf %93, %93 : vector<8x32xf32>
    %cst_38 = arith.constant dense<0.000000e+00> : vector<8xf32>
    %95 = vector.multi_reduction <add>, %94, %cst_38 [1] : vector<8x32xf32> to vector<8xf32>
    %96 = vector.shape_cast %95 : vector<8xf32> to vector<8x1xf32>
    %cst_39 = arith.constant 3.200000e+01 : f32
    %97 = vector.broadcast %cst_39 : f32 to vector<8x1xf32>
    %98 = arith.divf %96, %97 : vector<8x1xf32>
    %cst_40 = arith.constant 9.99999974E-6 : f32
    %99 = vector.broadcast %cst_40 : f32 to vector<8x1xf32>
    %100 = arith.addf %98, %99 : vector<8x1xf32>
    %101 = math.rsqrt %100 : vector<8x1xf32>
    %102 = vector.broadcast %101 : vector<8x1xf32> to vector<8x32xf32>
    %103 = arith.mulf %93, %102 : vector<8x32xf32>
    %104 = vector.broadcast %85 : vector<1x32xf32> to vector<8x32xf32>
    %105 = arith.mulf %103, %104 : vector<8x32xf32>
    %106 = vector.broadcast %87 : vector<1x32xf32> to vector<8x32xf32>
    %107 = arith.addf %105, %106 : vector<8x32xf32>
    %108 = arith.truncf %107 : vector<8x32xf32> to vector<8x32xbf16>
    %c0_41 = arith.constant 0 : index
    %c0_42 = arith.constant 0 : index
    %c0_43 = arith.constant 0 : index
    %109 = vector.load %arg10[%c0_41, %c0_42, %c0_43] : memref<1x32x64xbf16, #tpu.memory_space<vmem>>, vector<1x32x64xbf16>
    %110 = vector.shape_cast %109 : vector<1x32x64xbf16> to vector<32x64xbf16>
    %cst_44 = arith.constant dense<0.000000e+00> : vector<8x64xf32>
    %111 = tpu.matmul %108, %110, %cst_44 {dimension_numbers = #tpu.dot_dimension_numbers<[1], [0], [0], [1], [0, 0, 1, 1], [], []>} : vector<8x32xbf16>, vector<32x64xbf16>, vector<8x64xf32> -> vector<8x64xf32>
    %c0_45 = arith.constant 0 : index
    %c0_46 = arith.constant 0 : index
    %c0_47 = arith.constant 0 : index
    %112 = vector.load %arg11[%c0_45, %c0_46, %c0_47] : memref<1x1x64xf32, #tpu.memory_space<vmem>>, vector<1x1x64xf32>
    %113 = vector.shape_cast %112 : vector<1x1x64xf32> to vector<1x64xf32>
    %114 = vector.broadcast %113 : vector<1x64xf32> to vector<8x64xf32>
    %115 = arith.addf %111, %114 : vector<8x64xf32>
    %cst_48 = arith.constant 0.000000e+00 : f32
    %116 = vector.broadcast %cst_48 : f32 to vector<8x64xf32>
    %117 = arith.maximumf %115, %116 : vector<8x64xf32>
    %118 = arith.truncf %117 : vector<8x64xf32> to vector<8x64xbf16>
    %c0_49 = arith.constant 0 : index
    %c0_50 = arith.constant 0 : index
    %c0_51 = arith.constant 0 : index
    %119 = vector.load %arg12[%c0_49, %c0_50, %c0_51] : memref<1x64x32xbf16, #tpu.memory_space<vmem>>, vector<1x64x32xbf16>
    %120 = vector.shape_cast %119 : vector<1x64x32xbf16> to vector<64x32xbf16>
    %cst_52 = arith.constant dense<0.000000e+00> : vector<8x32xf32>
    %121 = tpu.matmul %118, %120, %cst_52 {dimension_numbers = #tpu.dot_dimension_numbers<[1], [0], [0], [1], [0, 0, 1, 1], [], []>} : vector<8x64xbf16>, vector<64x32xbf16>, vector<8x32xf32> -> vector<8x32xf32>
    %c0_53 = arith.constant 0 : index
    %c0_54 = arith.constant 0 : index
    %c0_55 = arith.constant 0 : index
    %122 = vector.load %arg13[%c0_53, %c0_54, %c0_55] : memref<1x1x32xf32, #tpu.memory_space<vmem>>, vector<1x1x32xf32>
    %123 = vector.shape_cast %122 : vector<1x1x32xf32> to vector<1x32xf32>
    %124 = vector.broadcast %123 : vector<1x32xf32> to vector<8x32xf32>
    %125 = arith.addf %121, %124 : vector<8x32xf32>
    %126 = arith.addf %107, %125 : vector<8x32xf32>
    %c0_56 = arith.constant 0 : index
    %c0_57 = arith.constant 0 : index
    %c0_58 = arith.constant 0 : index
    %127 = vector.load %arg16[%c0_56, %c0_57, %c0_58] : memref<1x1x32xf32, #tpu.memory_space<vmem>>, vector<1x1x32xf32>
    %128 = vector.shape_cast %127 : vector<1x1x32xf32> to vector<1x32xf32>
    %c0_59 = arith.constant 0 : index
    %c0_60 = arith.constant 0 : index
    %c0_61 = arith.constant 0 : index
    %129 = vector.load %arg17[%c0_59, %c0_60, %c0_61] : memref<1x1x32xf32, #tpu.memory_space<vmem>>, vector<1x1x32xf32>
    %130 = vector.shape_cast %129 : vector<1x1x32xf32> to vector<1x32xf32>
    %cst_62 = arith.constant dense<0.000000e+00> : vector<8xf32>
    %131 = vector.multi_reduction <add>, %126, %cst_62 [1] : vector<8x32xf32> to vector<8xf32>
    %132 = vector.shape_cast %131 : vector<8xf32> to vector<8x1xf32>
    %cst_63 = arith.constant 3.200000e+01 : f32
    %133 = vector.broadcast %cst_63 : f32 to vector<8x1xf32>
    %134 = arith.divf %132, %133 : vector<8x1xf32>
    %135 = vector.broadcast %134 : vector<8x1xf32> to vector<8x32xf32>
    %136 = arith.subf %126, %135 : vector<8x32xf32>
    %137 = arith.mulf %136, %136 : vector<8x32xf32>
    %cst_64 = arith.constant dense<0.000000e+00> : vector<8xf32>
    %138 = vector.multi_reduction <add>, %137, %cst_64 [1] : vector<8x32xf32> to vector<8xf32>
    %139 = vector.shape_cast %138 : vector<8xf32> to vector<8x1xf32>
    %cst_65 = arith.constant 3.200000e+01 : f32
    %140 = vector.broadcast %cst_65 : f32 to vector<8x1xf32>
    %141 = arith.divf %139, %140 : vector<8x1xf32>
    %cst_66 = arith.constant 9.99999974E-6 : f32
    %142 = vector.broadcast %cst_66 : f32 to vector<8x1xf32>
    %143 = arith.addf %141, %142 : vector<8x1xf32>
    %144 = math.rsqrt %143 : vector<8x1xf32>
    %145 = vector.broadcast %144 : vector<8x1xf32> to vector<8x32xf32>
    %146 = arith.mulf %136, %145 : vector<8x32xf32>
    %147 = vector.broadcast %128 : vector<1x32xf32> to vector<8x32xf32>
    %148 = arith.mulf %146, %147 : vector<8x32xf32>
    %149 = vector.broadcast %130 : vector<1x32xf32> to vector<8x32xf32>
    %150 = arith.addf %148, %149 : vector<8x32xf32>
    %c0_67 = arith.constant 0 : index
    %c0_68 = arith.constant 0 : index
    %151 = vector.load %arg22[%c0_67, %c0_68] : memref<8x32xf32, #tpu.memory_space<vmem>>, vector<8x32xf32>
    tpu.vector_store %arg22[%c0_67, %c0_68], %150 {strides = array<i32>} : memref<8x32xf32, #tpu.memory_space<vmem>>, vector<8x32xf32>,
    %c1_i32 = arith.constant 1 : i32
    %152 = arith.cmpi eq, %arg1, %c1_i32 : i32
    %153 = arith.extui %152 : i1 to i32
    %c0_i32_69 = arith.constant 0 : i32
    %154 = arith.cmpi ne, %153, %c0_i32_69 : i32
    scf.if %154 {
      %c0_70 = arith.constant 0 : index
      %c0_71 = arith.constant 0 : index
      %155 = vector.load %arg18[%c0_70, %c0_71] : memref<1x32xf32, #tpu.memory_space<vmem>>, vector<1x32xf32>
      %c0_72 = arith.constant 0 : index
      %c0_73 = arith.constant 0 : index
      %156 = vector.load %arg19[%c0_72, %c0_73] : memref<1x32xf32, #tpu.memory_space<vmem>>, vector<1x32xf32>
      %cst_74 = arith.constant dense<0.000000e+00> : vector<8xf32>
      %157 = vector.multi_reduction <add>, %150, %cst_74 [1] : vector<8x32xf32> to vector<8xf32>
      %158 = vector.shape_cast %157 : vector<8xf32> to vector<8x1xf32>
      %cst_75 = arith.constant 3.200000e+01 : f32
      %159 = vector.broadcast %cst_75 : f32 to vector<8x1xf32>
      %160 = arith.divf %158, %159 : vector<8x1xf32>
      %161 = vector.broadcast %160 : vector<8x1xf32> to vector<8x32xf32>
      %162 = arith.subf %150, %161 : vector<8x32xf32>
      %163 = arith.mulf %162, %162 : vector<8x32xf32>
      %cst_76 = arith.constant dense<0.000000e+00> : vector<8xf32>
      %164 = vector.multi_reduction <add>, %163, %cst_76 [1] : vector<8x32xf32> to vector<8xf32>
      %165 = vector.shape_cast %164 : vector<8xf32> to vector<8x1xf32>
      %cst_77 = arith.constant 3.200000e+01 : f32
      %166 = vector.broadcast %cst_77 : f32 to vector<8x1xf32>
      %167 = arith.divf %165, %166 : vector<8x1xf32>
      %cst_78 = arith.constant 9.99999974E-6 : f32
      %168 = vector.broadcast %cst_78 : f32 to vector<8x1xf32>
      %169 = arith.addf %167, %168 : vector<8x1xf32>
      %170 = math.rsqrt %169 : vector<8x1xf32>
      %171 = vector.broadcast %170 : vector<8x1xf32> to vector<8x32xf32>
      %172 = arith.mulf %162, %171 : vector<8x32xf32>
      %173 = vector.broadcast %155 : vector<1x32xf32> to vector<8x32xf32>
      %174 = arith.mulf %172, %173 : vector<8x32xf32>
      %175 = vector.broadcast %156 : vector<1x32xf32> to vector<8x32xf32>
      %176 = arith.addf %174, %175 : vector<8x32xf32>
      %177 = vector.shape_cast %176 : vector<8x32xf32> to vector<1x8x32xf32>
      %c0_79 = arith.constant 0 : index
      %c0_80 = arith.constant 0 : index
      %c0_81 = arith.constant 0 : index
      %178 = vector.load %arg20[%c0_79, %c0_80, %c0_81] : memref<1x8x32xf32, #tpu.memory_space<vmem>>, vector<1x8x32xf32>
      tpu.vector_store %arg20[%c0_79, %c0_80, %c0_81], %177 {strides = array<i32>} : memref<1x8x32xf32, #tpu.memory_space<vmem>>, vector<1x8x32xf32>,
      %cst_82 = arith.constant dense<0.000000e+00> : vector<8x16xf32>
      %179 = vector.multi_reduction <add>, %63, %cst_82 [0] : vector<4x8x16xf32> to vector<8x16xf32>
      %cst_83 = arith.constant 4.000000e+00 : f32
      %180 = vector.broadcast %cst_83 : f32 to vector<8x16xf32>
      %181 = arith.divf %179, %180 : vector<8x16xf32>
      %182 = vector.shape_cast %181 : vector<8x16xf32> to vector<1x8x16xf32>
      %c0_84 = arith.constant 0 : index
      %c0_85 = arith.constant 0 : index
      %c0_86 = arith.constant 0 : index
      %183 = vector.load %arg21[%c0_84, %c0_85, %c0_86] : memref<1x8x16xf32, #tpu.memory_space<vmem>>, vector<1x8x16xf32>
      tpu.vector_store %arg21[%c0_84, %c0_85, %c0_86], %182 {strides = array<i32>} : memref<1x8x16xf32, #tpu.memory_space<vmem>>, vector<1x8x16xf32>,
    } else {
    }
    return
  }
  func.func @transform_0(%arg0: i32, %arg1: i32) -> (i32, i32, i32) {
    %c0_i32 = arith.constant 0 : i32
    %c0_i32_0 = arith.constant 0 : i32
    %c0_i32_1 = arith.constant 0 : i32
    return %arg0, %c0_i32, %c0_i32_0 : i32, i32, i32
  }
  func.func @transform_1(%arg0: i32, %arg1: i32) -> (i32, i32, i32) {
    %c0_i32 = arith.constant 0 : i32
    %c0_i32_0 = arith.constant 0 : i32
    %c0_i32_1 = arith.constant 0 : i32
    return %arg0, %c0_i32, %c0_i32_0 : i32, i32, i32
  }
  func.func @transform_2(%arg0: i32, %arg1: i32) -> (i32, i32, i32) {
    %c0_i32 = arith.constant 0 : i32
    %c0_i32_0 = arith.constant 0 : i32
    %c0_i32_1 = arith.constant 0 : i32
    return %arg1, %c0_i32, %c0_i32_0 : i32, i32, i32
  }
  func.func @transform_3(%arg0: i32, %arg1: i32) -> (i32, i32, i32) {
    %c0_i32 = arith.constant 0 : i32
    %c0_i32_0 = arith.constant 0 : i32
    %c0_i32_1 = arith.constant 0 : i32
    return %arg1, %c0_i32, %c0_i32_0 : i32, i32, i32
  }
  func.func @transform_4(%arg0: i32, %arg1: i32) -> (i32, i32, i32) {
    %c0_i32 = arith.constant 0 : i32
    %c0_i32_0 = arith.constant 0 : i32
    %c0_i32_1 = arith.constant 0 : i32
    return %arg1, %c0_i32, %c0_i32_0 : i32, i32, i32
  }
  func.func @transform_5(%arg0: i32, %arg1: i32) -> (i32, i32, i32) {
    %c0_i32 = arith.constant 0 : i32
    %c0_i32_0 = arith.constant 0 : i32
    %c0_i32_1 = arith.constant 0 : i32
    return %arg1, %c0_i32, %c0_i32_0 : i32, i32, i32
  }
  func.func @transform_6(%arg0: i32, %arg1: i32) -> (i32, i32, i32) {
    %c0_i32 = arith.constant 0 : i32
    %c0_i32_0 = arith.constant 0 : i32
    %c0_i32_1 = arith.constant 0 : i32
    return %arg1, %c0_i32, %c0_i32_0 : i32, i32, i32
  }
  func.func @transform_7(%arg0: i32, %arg1: i32) -> (i32, i32, i32) {
    %c0_i32 = arith.constant 0 : i32
    %c0_i32_0 = arith.constant 0 : i32
    %c0_i32_1 = arith.constant 0 : i32
    return %arg1, %c0_i32, %c0_i32_0 : i32, i32, i32
  }
  func.func @transform_8(%arg0: i32, %arg1: i32) -> (i32, i32, i32) {
    %c0_i32 = arith.constant 0 : i32
    %c0_i32_0 = arith.constant 0 : i32
    %c0_i32_1 = arith.constant 0 : i32
    return %arg1, %c0_i32, %c0_i32_0 : i32, i32, i32
  }
  func.func @transform_9(%arg0: i32, %arg1: i32) -> (i32, i32, i32) {
    %c0_i32 = arith.constant 0 : i32
    %c0_i32_0 = arith.constant 0 : i32
    %c0_i32_1 = arith.constant 0 : i32
    return %arg1, %c0_i32, %c0_i32_0 : i32, i32, i32
  }
  func.func @transform_10(%arg0: i32, %arg1: i32) -> (i32, i32, i32) {
    %c0_i32 = arith.constant 0 : i32
    %c0_i32_0 = arith.constant 0 : i32
    %c0_i32_1 = arith.constant 0 : i32
    return %arg1, %c0_i32, %c0_i32_0 : i32, i32, i32
  }
  func.func @transform_11(%arg0: i32, %arg1: i32) -> (i32, i32, i32) {
    %c0_i32 = arith.constant 0 : i32
    %c0_i32_0 = arith.constant 0 : i32
    %c0_i32_1 = arith.constant 0 : i32
    return %arg1, %c0_i32, %c0_i32_0 : i32, i32, i32
  }
  func.func @transform_12(%arg0: i32, %arg1: i32) -> (i32, i32, i32) {
    %c0_i32 = arith.constant 0 : i32
    %c0_i32_0 = arith.constant 0 : i32
    %c0_i32_1 = arith.constant 0 : i32
    return %arg1, %c0_i32, %c0_i32_0 : i32, i32, i32
  }
  func.func @transform_13(%arg0: i32, %arg1: i32) -> (i32, i32, i32) {
    %c0_i32 = arith.constant 0 : i32
    %c0_i32_0 = arith.constant 0 : i32
    %c0_i32_1 = arith.constant 0 : i32
    return %arg1, %c0_i32, %c0_i32_0 : i32, i32, i32
  }
  func.func @transform_14(%arg0: i32, %arg1: i32) -> (i32, i32, i32) {
    %c0_i32 = arith.constant 0 : i32
    %c0_i32_0 = arith.constant 0 : i32
    %c0_i32_1 = arith.constant 0 : i32
    return %arg1, %c0_i32, %c0_i32_0 : i32, i32, i32
  }
  func.func @transform_15(%arg0: i32, %arg1: i32) -> (i32, i32, i32) {
    %c0_i32 = arith.constant 0 : i32
    %c0_i32_0 = arith.constant 0 : i32
    %c0_i32_1 = arith.constant 0 : i32
    return %arg1, %c0_i32, %c0_i32_0 : i32, i32, i32
  }
  func.func @transform_16(%arg0: i32, %arg1: i32) -> (i32, i32) {
    %c0_i32 = arith.constant 0 : i32
    %c0_i32_0 = arith.constant 0 : i32
    %c0_i32_1 = arith.constant 0 : i32
    return %c0_i32, %c0_i32_0 : i32, i32
  }
  func.func @transform_17(%arg0: i32, %arg1: i32) -> (i32, i32) {
    %c0_i32 = arith.constant 0 : i32
    %c0_i32_0 = arith.constant 0 : i32
    %c0_i32_1 = arith.constant 0 : i32
    return %c0_i32, %c0_i32_0 : i32, i32
  }
  func.func @transform_18(%arg0: i32, %arg1: i32) -> (i32, i32, i32) {
    %c0_i32 = arith.constant 0 : i32
    %c0_i32_0 = arith.constant 0 : i32
    %c0_i32_1 = arith.constant 0 : i32
    return %arg0, %c0_i32, %c0_i32_0 : i32, i32, i32
  }
  func.func @transform_19(%arg0: i32, %arg1: i32) -> (i32, i32, i32) {
    %c0_i32 = arith.constant 0 : i32
    %c0_i32_0 = arith.constant 0 : i32
    %c0_i32_1 = arith.constant 0 : i32
    return %arg0, %c0_i32, %c0_i32_0 : i32, i32, i32
  }
}

</mosaic_0001>

<llo_original>
// kernel: tpu_custom_call.1
$region0: #{tpu_custom_call.1}
  #allocation0 [shape = 'u32[]', space=smem, size = 0x4, offset = 0x4, fixed_abs, tag = 'smem constant byte address 0x4 - core index']
  #allocation1 [shape = 'u32[72,128]{1,0:T(1,128)}', space=vmem, size = 0x9000, scoped, tag = 'internal scratch']
  #allocation2 [shape = 'f32[8,32]{1,0:T(8,128)}', space=vmem, size = 0x1000, scoped, tag = 'scratch operand']
  %s0 = inlined_call_operand.hbm [shape: f32[2,8,32], index: 0, kind: input, shape index: {}]
  %s1 = inlined_call_operand.vmem [shape: f32[2,16,32], index: 1, kind: input, shape index: {}]
  %s2 = inlined_call_operand.vmem [shape: bf16[2,32,32], index: 2, kind: input, shape index: {}]
  %s3 = inlined_call_operand.hbm [shape: f32[2,1,32], index: 3, kind: input, shape index: {}]
  %s4 = inlined_call_operand.vmem [shape: bf16[2,32,64], index: 4, kind: input, shape index: {}]
  %s5 = inlined_call_operand.vmem [shape: f32[2,1,64], index: 5, kind: input, shape index: {}]
  %s6 = inlined_call_operand.hbm [shape: bf16[2,32,32], index: 6, kind: input, shape index: {}]
  %s7 = inlined_call_operand.vmem [shape: f32[2,1,32], index: 7, kind: input, shape index: {}]
  %s8 = inlined_call_operand.hbm [shape: bf16[2,32,64], index: 8, kind: input, shape index: {}]
  %s9 = inlined_call_operand.vmem [shape: f32[2,1,64], index: 9, kind: input, shape index: {}]
  %s10 = inlined_call_operand.vmem [shape: bf16[2,64,32], index: 10, kind: input, shape index: {}]
  %s11 = inlined_call_operand.vmem [shape: f32[2,1,32], index: 11, kind: input, shape index: {}]
  %s12 = inlined_call_operand.vmem [shape: f32[2,1,32], index: 12, kind: input, shape index: {}]
  %s13 = inlined_call_operand.hbm [shape: f32[2,1,32], index: 13, kind: input, shape index: {}]
  %s14 = inlined_call_operand.vmem [shape: f32[2,1,32], index: 14, kind: input, shape index: {}]
  %s15 = inlined_call_operand.hbm [shape: f32[2,1,32], index: 15, kind: input, shape index: {}]
  %s16 = inlined_call_operand.vmem [shape: f32[1,32], index: 16, kind: input, shape index: {}]
  %s17 = inlined_call_operand.vmem [shape: f32[1,32], index: 17, kind: input, shape index: {}]
  %s18 = inlined_call_operand.hbm [shape: f32[2,8,32], index: 18, kind: output, shape index: {0}]
  %s19 = inlined_call_operand.hbm [shape: f32[2,8,16], index: 19, kind: output, shape index: {1}]
  %20 = xla_tuple %s18, %s19
  %s21 = sld [smem:[#allocation0]]
  $region145: #{tpu_custom_call.1} parent=0
    _
  %s23 = ssub.s32 1, %s21
  %s24 = scalar_select 0, %s23, %s21
  $region1: #{tpu_custom_call.1} parent=0
    #allocation3 [shape = 'u8[8192]{0}', space=vmem, size = 0x2000, scoped, tag = 'input window, operand 0']
    #allocation4 [shape = 's32[2]{0}', space=sflag, size = 0x8, scoped, tag = 'scoped memory for tpu_custom_call.1']
    #allocation5 [shape = 's32[2]{0}', space=sflag, size = 0x8, scoped, tag = 'scoped memory for tpu_custom_call.1']
    #allocation6 [shape = 'u8[1024]{0}', space=vmem, size = 0x400, scoped, tag = 'input window, operand 3']
    #allocation7 [shape = 's32[2]{0}', space=sflag, size = 0x8, scoped, tag = 'scoped memory for tpu_custom_call.1']
    #allocation8 [shape = 'u8[16384]{0}', space=vmem, size = 0x4000, scoped, tag = 'input window, operand 6']
    #allocation9 [shape = 'u8[16384]{0}', space=vmem, size = 0x4000, scoped, tag = 'input window, operand 8']
    #allocation10 [shape = 's32[2]{0}', space=sflag, size = 0x8, scoped, tag = 'scoped memory for tpu_custom_call.1']
    #allocation11 [shape = 'u8[1024]{0}', space=vmem, size = 0x400, scoped, tag = 'input window, operand 13']
    #allocation12 [shape = 'u8[1024]{0}', space=vmem, size = 0x400, scoped, tag = 'input window, operand 15']
    #allocation13 [shape = 's32[2]{0}', space=sflag, size = 0x8, scoped, tag = 'scoped memory for tpu_custom_call.1']
    #allocation14 [shape = 'u8[8192]{0}', space=vmem, size = 0x2000, scoped, tag = 'output window, operand 0']
    #allocation15 [shape = 'u8[8192]{0}', space=vmem, size = 0x2000, scoped, tag = 'output window, operand 1']
    #allocation16 [shape = 's32[2]{0}', space=sflag, size = 0x8, scoped, tag = 'scoped memory for tpu_custom_call.1']
    %25 = vsyncpa [#allocation4], 0
    %s26 = scalar_lea.sflag [#allocation4], 1
    %27 = vsyncpa %s26, 0
    %28 = vsyncpa [#allocation7], 0
    %s29 = scalar_lea.sflag [#allocation7], 1
    %30 = vsyncpa %s29, 0
    %31 = vsyncpa [#allocation10], 0
    %s32 = scalar_lea.sflag [#allocation10], 1
    %33 = vsyncpa %s32, 0
    %34 = vsyncpa [#allocation13], 0
    %s35 = scalar_lea.sflag [#allocation13], 1
    %36 = vsyncpa %s35, 0
    %37 = vsyncpa [#allocation5], 0
    %s38 = scalar_lea.sflag [#allocation5], 1
    %39 = vsyncpa %s38, 0
    %40 = vsyncpa [#allocation16], 0
    %s41 = scalar_lea.sflag [#allocation16], 1
    %42 = vsyncpa %s41, 0
    loop: start=0, step=1, limit=6
    $region2: #{tpu_custom_call.1} parent=1 // loop_pre_header
      _
    $region3: #{tpu_custom_call.1} parent=1 // loop_header
      %s44 = sphi 0, %s48
      %p45 = scmp.ge.s32.totalorder %s44, 6
      %s51 = sphi 0, %s63
      %s52 = sphi 0, %s59
      %s53 = sphi 0, %s51
      %s54 = sphi 0, %s52
      %s55 = sphi 0, %s53
      %s56 = sphi 0, %s54
      %s66 = sphi 0, %s68
      %s69 = sphi 0, %s66
      %s70 = sphi 0, %s69
      %s86 = sphi 0, %s70
      %s92 = sphi 0, %s94
      %s95 = sphi 0, %s92
      %s96 = sphi 0, %s95
      %s112 = sphi 0, %s96
      %s118 = sphi 0, %s120
      %s121 = sphi 0, %s118
      %s122 = sphi 0, %s121
      %s138 = sphi 0, %s122
      %s144 = sphi 0, %s146
      %s147 = sphi 0, %s144
      %s148 = sphi 0, %s147
      %s164 = sphi 0, %s148
      %s170 = sphi 0, %s172
      %s173 = sphi 0, %s170
      %s174 = sphi 0, %s173
      %s190 = sphi 0, %s174
      %s196 = sphi 0, %s198
      %s199 = sphi 0, %s196
      %s200 = sphi 0, %s199
      %s216 = sphi 0, %s200
      %s222 = sphi 0, %s224
      %s225 = sphi 0, %s222
      %s226 = sphi 0, %s225
      %s242 = sphi 0, %s226
      %s248 = sphi 0, %s250
      %s251 = sphi 0, %s248
      %s252 = sphi 0, %s251
      %s268 = sphi 0, %s252
      %s274 = sphi 0, %s276
      %s277 = sphi 0, %s274
      %s278 = sphi 0, %s277
      %s294 = sphi 0, %s278
      %s300 = sphi 0, %s302
      %s303 = sphi 0, %s300
      %s304 = sphi 0, %s303
      %s320 = sphi 0, %s304
      %s326 = sphi 0, %s328
      %s329 = sphi 0, %s326
      %s330 = sphi 0, %s329
      %s346 = sphi 0, %s330
      %s352 = sphi 0, %s354
      %s355 = sphi 0, %s352
      %s356 = sphi 0, %s355
      %s372 = sphi 0, %s356
      %s378 = sphi 0, %s380
      %s381 = sphi 0, %s378
      %s382 = sphi 0, %s381
      %s398 = sphi 0, %s382
      %s404 = sphi 0, %s406
      %s407 = sphi 0, %s404
      %s408 = sphi 0, %s407
      %s424 = sphi 0, %s408
      %s430 = sphi 0, %s432
      %s433 = sphi 0, %s430
      %s434 = sphi 0, %s433
      %s450 = sphi 0, %s434
      %s456 = sphi 0, %s458
      %s459 = sphi 0, %s456
      %s460 = sphi 0, %s459
      %s476 = sphi 0, %s460
      %s480 = sphi 0, %s480
      %s482 = sphi 0, %s480
      %s483 = sphi 0, %s482
      %s497 = sphi 0, %s483
      %s501 = sphi 0, %s501
      %s503 = sphi 0, %s501
      %s504 = sphi 0, %s503
      %s518 = sphi 0, %s504
      %s524 = sphi 0, %s526
      %s527 = sphi 0, %s524
      %s528 = sphi 0, %s527
      %s544 = sphi 0, %s528
      %s550 = sphi 0, %s552
      %s553 = sphi 0, %s550
      %s554 = sphi 0, %s553
      %s570 = sphi 0, %s554
    $region4: #{tpu_custom_call.1} parent=1 // loop_header_branch
      %47 = sbr.rel (%p45) target = $region8
    $region5: #{tpu_custom_call.1} parent=1 // loop_body
      %s49 = ssub.s32 %s44, 1
      %s50 = ssub.s32 %s44, 2
      %s57 = sadd.s32 1, %s52
      %p58 = scmp.ge.s32.totalorder %s57, 2
      %s59 = scalar_select %p58, 0, %s57
      %s60 = sadd.s32 1, %s51
      %s61 = scalar_select %p58, %s60, %s51
      %p62 = scmp.ge.s32.totalorder %s61, 2
      %s63 = scalar_select %p62, 0, %s61
      %s64 = ssub.s32 %s51, %s63
      %p65 = scmp.eq.s32.totalorder %s64, 0
      %s67 = sadd.s32 %s66, 1
      %s68 = scalar_select %p65, %s66, %s67
      %p71 = pneg %p65
      %p72 = scmp.eq.s32.totalorder %s44, 3
      %p73 = por %p71, %p72
      %p74 = scmp.ne.s32.totalorder %s66, %s69
      %p75 = scmp.eq.s32.totalorder %s44, 0
      %p76 = por %p74, %p75
      %p77 = scmp.ne.s32.totalorder %s66, %s69
      %p78 = scmp.eq.s32.totalorder %s49, 3
      %p79 = por %p77, %p78
      %p80 = scmp.ne.s32.totalorder %s69, %s70
      %p81 = scmp.eq.s32.totalorder %s49, 0
      %p82 = por %p80, %p81
      %p83 = scmp.ne.s32.totalorder %s69, %s70
      %p84 = scmp.eq.s32.totalorder %s50, 3
      %p85 = por %p83, %p84
      %p87 = scmp.ne.s32.totalorder %s70, %s86
      %p88 = scmp.eq.s32.totalorder %s50, 0
      %p89 = por %p87, %p88
      %s90 = ssub.s32 %s51, %s63
      %p91 = scmp.eq.s32.totalorder %s90, 0
      %s93 = sadd.s32 %s92, 1
      %s94 = scalar_select %p91, %s92, %s93
      %p97 = pneg %p91
      %p98 = scmp.eq.s32.totalorder %s44, 3
      %p99 = por %p97, %p98
      %p100 = scmp.ne.s32.totalorder %s92, %s95
      %p101 = scmp.eq.s32.totalorder %s44, 0
      %p102 = por %p100, %p101
      %p103 = scmp.ne.s32.totalorder %s92, %s95
      %p104 = scmp.eq.s32.totalorder %s49, 3
      %p105 = por %p103, %p104
      %p106 = scmp.ne.s32.totalorder %s95, %s96
      %p107 = scmp.eq.s32.totalorder %s49, 0
      %p108 = por %p106, %p107
      %p109 = scmp.ne.s32.totalorder %s95, %s96
      %p110 = scmp.eq.s32.totalorder %s50, 3
      %p111 = por %p109, %p110
      %p113 = scmp.ne.s32.totalorder %s96, %s112
      %p114 = scmp.eq.s32.totalorder %s50, 0
      %p115 = por %p113, %p114
      %s116 = ssub.s32 %s52, %s59
      %p117 = scmp.eq.s32.totalorder %s116, 0
      %s119 = sadd.s32 %s118, 1
      %s120 = scalar_select %p117, %s118, %s119
      %p123 = pneg %p117
      %p124 = scmp.eq.s32.totalorder %s44, 3
      %p125 = por %p123, %p124
      %p126 = scmp.ne.s32.totalorder %s118, %s121
      %p127 = scmp.eq.s32.totalorder %s44, 0
      %p128 = por %p126, %p127
      %p129 = scmp.ne.s32.totalorder %s118, %s121
      %p130 = scmp.eq.s32.totalorder %s49, 3
      %p131 = por %p129, %p130
      %p132 = scmp.ne.s32.totalorder %s121, %s122
      %p133 = scmp.eq.s32.totalorder %s49, 0
      %p134 = por %p132, %p133
      %p135 = scmp.ne.s32.totalorder %s121, %s122
      %p136 = scmp.eq.s32.totalorder %s50, 3
      %p137 = por %p135, %p136
      %p139 = scmp.ne.s32.totalorder %s122, %s138
      %p140 = scmp.eq.s32.totalorder %s50, 0
      %p141 = por %p139, %p140
      %s142 = ssub.s32 %s52, %s59
      %p143 = scmp.eq.s32.totalorder %s142, 0
      %s145 = sadd.s32 %s144, 1
      %s146 = scalar_select %p143, %s144, %s145
      %p149 = pneg %p143
      %p150 = scmp.eq.s32.totalorder %s44, 3
      %p151 = por %p149, %p150
      %p152 = scmp.ne.s32.totalorder %s144, %s147
      %p153 = scmp.eq.s32.totalorder %s44, 0
      %p154 = por %p152, %p153
      %p155 = scmp.ne.s32.totalorder %s144, %s147
      %p156 = scmp.eq.s32.totalorder %s49, 3
      %p157 = por %p155, %p156
      %p158 = scmp.ne.s32.totalorder %s147, %s148
      %p159 = scmp.eq.s32.totalorder %s49, 0
      %p160 = por %p158, %p159
      %p161 = scmp.ne.s32.totalorder %s147, %s148
      %p162 = scmp.eq.s32.totalorder %s50, 3
      %p163 = por %p161, %p162
      %p165 = scmp.ne.s32.totalorder %s148, %s164
      %p166 = scmp.eq.s32.totalorder %s50, 0
      %p167 = por %p165, %p166
      %s168 = ssub.s32 %s52, %s59
      %p169 = scmp.eq.s32.totalorder %s168, 0
      %s171 = sadd.s32 %s170, 1
      %s172 = scalar_select %p169, %s170, %s171
      %p175 = pneg %p169
      %p176 = scmp.eq.s32.totalorder %s44, 3
      %p177 = por %p175, %p176
      %p178 = scmp.ne.s32.totalorder %s170, %s173
      %p179 = scmp.eq.s32.totalorder %s44, 0
      %p180 = por %p178, %p179
      %p181 = scmp.ne.s32.totalorder %s170, %s173
      %p182 = scmp.eq.s32.totalorder %s49, 3
      %p183 = por %p181, %p182
      %p184 = scmp.ne.s32.totalorder %s173, %s174
      %p185 = scmp.eq.s32.totalorder %s49, 0
      %p186 = por %p184, %p185
      %p187 = scmp.ne.s32.totalorder %s173, %s174
      %p188 = scmp.eq.s32.totalorder %s50, 3
      %p189 = por %p187, %p188
      %p191 = scmp.ne.s32.totalorder %s174, %s190
      %p192 = scmp.eq.s32.totalorder %s50, 0
      %p193 = por %p191, %p192
      %s194 = ssub.s32 %s52, %s59
      %p195 = scmp.eq.s32.totalorder %s194, 0
      %s197 = sadd.s32 %s196, 1
      %s198 = scalar_select %p195, %s196, %s197
      %p201 = pneg %p195
      %p202 = scmp.eq.s32.totalorder %s44, 3
      %p203 = por %p201, %p202
      %p204 = scmp.ne.s32.totalorder %s196, %s199
      %p205 = scmp.eq.s32.totalorder %s44, 0
      %p206 = por %p204, %p205
      %p207 = scmp.ne.s32.totalorder %s196, %s199
      %p208 = scmp.eq.s32.totalorder %s49, 3
      %p209 = por %p207, %p208
      %p210 = scmp.ne.s32.totalorder %s199, %s200
      %p211 = scmp.eq.s32.totalorder %s49, 0
      %p212 = por %p210, %p211
      %p213 = scmp.ne.s32.totalorder %s199, %s200
      %p214 = scmp.eq.s32.totalorder %s50, 3
      %p215 = por %p213, %p214
      %p217 = scmp.ne.s32.totalorder %s200, %s216
      %p218 = scmp.eq.s32.totalorder %s50, 0
      %p219 = por %p217, %p218
      %s220 = ssub.s32 %s52, %s59
      %p221 = scmp.eq.s32.totalorder %s220, 0
      %s223 = sadd.s32 %s222, 1
      %s224 = scalar_select %p221, %s222, %s223
      %p227 = pneg %p221
      %p228 = scmp.eq.s32.totalorder %s44, 3
      %p229 = por %p227, %p228
      %p230 = scmp.ne.s32.totalorder %s222, %s225
      %p231 = scmp.eq.s32.totalorder %s44, 0
      %p232 = por %p230, %p231
      %p233 = scmp.ne.s32.totalorder %s222, %s225
      %p234 = scmp.eq.s32.totalorder %s49, 3
      %p235 = por %p233, %p234
      %p236 = scmp.ne.s32.totalorder %s225, %s226
      %p237 = scmp.eq.s32.totalorder %s49, 0
      %p238 = por %p236, %p237
      %p239 = scmp.ne.s32.totalorder %s225, %s226
      %p240 = scmp.eq.s32.totalorder %s50, 3
      %p241 = por %p239, %p240
      %p243 = scmp.ne.s32.totalorder %s226, %s242
      %p244 = scmp.eq.s32.totalorder %s50, 0
      %p245 = por %p243, %p244
      %s246 = ssub.s32 %s52, %s59
      %p247 = scmp.eq.s32.totalorder %s246, 0
      %s249 = sadd.s32 %s248, 1
      %s250 = scalar_select %p247, %s248, %s249
      %p253 = pneg %p247
      %p254 = scmp.eq.s32.totalorder %s44, 3
      %p255 = por %p253, %p254
      %p256 = scmp.ne.s32.totalorder %s248, %s251
      %p257 = scmp.eq.s32.totalorder %s44, 0
      %p258 = por %p256, %p257
      %p259 = scmp.ne.s32.totalorder %s248, %s251
      %p260 = scmp.eq.s32.totalorder %s49, 3
      %p261 = por %p259, %p260
      %p262 = scmp.ne.s32.totalorder %s251, %s252
      %p263 = scmp.eq.s32.totalorder %s49, 0
      %p264 = por %p262, %p263
      %p265 = scmp.ne.s32.totalorder %s251, %s252
      %p266 = scmp.eq.s32.totalorder %s50, 3
      %p267 = por %p265, %p266
      %p269 = scmp.ne.s32.totalorder %s252, %s268
      %p270 = scmp.eq.s32.totalorder %s50, 0
      %p271 = por %p269, %p270
      %s272 = ssub.s32 %s52, %s59
      %p273 = scmp.eq.s32.totalorder %s272, 0
      %s275 = sadd.s32 %s274, 1
      %s276 = scalar_select %p273, %s274, %s275
      %p279 = pneg %p273
      %p280 = scmp.eq.s32.totalorder %s44, 3
      %p281 = por %p279, %p280
      %p282 = scmp.ne.s32.totalorder %s274, %s277
      %p283 = scmp.eq.s32.totalorder %s44, 0
      %p284 = por %p282, %p283
      %p285 = scmp.ne.s32.totalorder %s274, %s277
      %p286 = scmp.eq.s32.totalorder %s49, 3
      %p287 = por %p285, %p286
      %p288 = scmp.ne.s32.totalorder %s277, %s278
      %p289 = scmp.eq.s32.totalorder %s49, 0
      %p290 = por %p288, %p289
      %p291 = scmp.ne.s32.totalorder %s277, %s278
      %p292 = scmp.eq.s32.totalorder %s50, 3
      %p293 = por %p291, %p292
      %p295 = scmp.ne.s32.totalorder %s278, %s294
      %p296 = scmp.eq.s32.totalorder %s50, 0
      %p297 = por %p295, %p296
      %s298 = ssub.s32 %s52, %s59
      %p299 = scmp.eq.s32.totalorder %s298, 0
      %s301 = sadd.s32 %s300, 1
      %s302 = scalar_select %p299, %s300, %s301
      %p305 = pneg %p299
      %p306 = scmp.eq.s32.totalorder %s44, 3
      %p307 = por %p305, %p306
      %p308 = scmp.ne.s32.totalorder %s300, %s303
      %p309 = scmp.eq.s32.totalorder %s44, 0
      %p310 = por %p308, %p309
      %p311 = scmp.ne.s32.totalorder %s300, %s303
      %p312 = scmp.eq.s32.totalorder %s49, 3
      %p313 = por %p311, %p312
      %p314 = scmp.ne.s32.totalorder %s303, %s304
      %p315 = scmp.eq.s32.totalorder %s49, 0
      %p316 = por %p314, %p315
      %p317 = scmp.ne.s32.totalorder %s303, %s304
      %p318 = scmp.eq.s32.totalorder %s50, 3
      %p319 = por %p317, %p318
      %p321 = scmp.ne.s32.totalorder %s304, %s320
      %p322 = scmp.eq.s32.totalorder %s50, 0
      %p323 = por %p321, %p322
      %s324 = ssub.s32 %s52, %s59
      %p325 = scmp.eq.s32.totalorder %s324, 0
      %s327 = sadd.s32 %s326, 1
      %s328 = scalar_select %p325, %s326, %s327
      %p331 = pneg %p325
      %p332 = scmp.eq.s32.totalorder %s44, 3
      %p333 = por %p331, %p332
      %p334 = scmp.ne.s32.totalorder %s326, %s329
      %p335 = scmp.eq.s32.totalorder %s44, 0
      %p336 = por %p334, %p335
      %p337 = scmp.ne.s32.totalorder %s326, %s329
      %p338 = scmp.eq.s32.totalorder %s49, 3
      %p339 = por %p337, %p338
      %p340 = scmp.ne.s32.totalorder %s329, %s330
      %p341 = scmp.eq.s32.totalorder %s49, 0
      %p342 = por %p340, %p341
      %p343 = scmp.ne.s32.totalorder %s329, %s330
      %p344 = scmp.eq.s32.totalorder %s50, 3
      %p345 = por %p343, %p344
      %p347 = scmp.ne.s32.totalorder %s330, %s346
      %p348 = scmp.eq.s32.totalorder %s50, 0
      %p349 = por %p347, %p348
      %s350 = ssub.s32 %s52, %s59
      %p351 = scmp.eq.s32.totalorder %s350, 0
      %s353 = sadd.s32 %s352, 1
      %s354 = scalar_select %p351, %s352, %s353
      %p357 = pneg %p351
      %p358 = scmp.eq.s32.totalorder %s44, 3
      %p359 = por %p357, %p358
      %p360 = scmp.ne.s32.totalorder %s352, %s355
      %p361 = scmp.eq.s32.totalorder %s44, 0
      %p362 = por %p360, %p361
      %p363 = scmp.ne.s32.totalorder %s352, %s355
      %p364 = scmp.eq.s32.totalorder %s49, 3
      %p365 = por %p363, %p364
      %p366 = scmp.ne.s32.totalorder %s355, %s356
      %p367 = scmp.eq.s32.totalorder %s49, 0
      %p368 = por %p366, %p367
      %p369 = scmp.ne.s32.totalorder %s355, %s356
      %p370 = scmp.eq.s32.totalorder %s50, 3
      %p371 = por %p369, %p370
      %p373 = scmp.ne.s32.totalorder %s356, %s372
      %p374 = scmp.eq.s32.totalorder %s50, 0
      %p375 = por %p373, %p374
      %s376 = ssub.s32 %s52, %s59
      %p377 = scmp.eq.s32.totalorder %s376, 0
      %s379 = sadd.s32 %s378, 1
      %s380 = scalar_select %p377, %s378, %s379
      %p383 = pneg %p377
      %p384 = scmp.eq.s32.totalorder %s44, 3
      %p385 = por %p383, %p384
      %p386 = scmp.ne.s32.totalorder %s378, %s381
      %p387 = scmp.eq.s32.totalorder %s44, 0
      %p388 = por %p386, %p387
      %p389 = scmp.ne.s32.totalorder %s378, %s381
      %p390 = scmp.eq.s32.totalorder %s49, 3
      %p391 = por %p389, %p390
      %p392 = scmp.ne.s32.totalorder %s381, %s382
      %p393 = scmp.eq.s32.totalorder %s49, 0
      %p394 = por %p392, %p393
      %p395 = scmp.ne.s32.totalorder %s381, %s382
      %p396 = scmp.eq.s32.totalorder %s50, 3
      %p397 = por %p395, %p396
      %p399 = scmp.ne.s32.totalorder %s382, %s398
      %p400 = scmp.eq.s32.totalorder %s50, 0
      %p401 = por %p399, %p400
      %s402 = ssub.s32 %s52, %s59
      %p403 = scmp.eq.s32.totalorder %s402, 0
      %s405 = sadd.s32 %s404, 1
      %s406 = scalar_select %p403, %s404, %s405
      %p409 = pneg %p403
      %p410 = scmp.eq.s32.totalorder %s44, 3
      %p411 = por %p409, %p410
      %p412 = scmp.ne.s32.totalorder %s404, %s407
      %p413 = scmp.eq.s32.totalorder %s44, 0
      %p414 = por %p412, %p413
      %p415 = scmp.ne.s32.totalorder %s404, %s407
      %p416 = scmp.eq.s32.totalorder %s49, 3
      %p417 = por %p415, %p416
      %p418 = scmp.ne.s32.totalorder %s407, %s408
      %p419 = scmp.eq.s32.totalorder %s49, 0
      %p420 = por %p418, %p419
      %p421 = scmp.ne.s32.totalorder %s407, %s408
      %p422 = scmp.eq.s32.totalorder %s50, 3
      %p423 = por %p421, %p422
      %p425 = scmp.ne.s32.totalorder %s408, %s424
      %p426 = scmp.eq.s32.totalorder %s50, 0
      %p427 = por %p425, %p426
      %s428 = ssub.s32 %s52, %s59
      %p429 = scmp.eq.s32.totalorder %s428, 0
      %s431 = sadd.s32 %s430, 1
      %s432 = scalar_select %p429, %s430, %s431
      %p435 = pneg %p429
      %p436 = scmp.eq.s32.totalorder %s44, 3
      %p437 = por %p435, %p436
      %p438 = scmp.ne.s32.totalorder %s430, %s433
      %p439 = scmp.eq.s32.totalorder %s44, 0
      %p440 = por %p438, %p439
      %p441 = scmp.ne.s32.totalorder %s430, %s433
      %p442 = scmp.eq.s32.totalorder %s49, 3
      %p443 = por %p441, %p442
      %p444 = scmp.ne.s32.totalorder %s433, %s434
      %p445 = scmp.eq.s32.totalorder %s49, 0
      %p446 = por %p444, %p445
      %p447 = scmp.ne.s32.totalorder %s433, %s434
      %p448 = scmp.eq.s32.totalorder %s50, 3
      %p449 = por %p447, %p448
      %p451 = scmp.ne.s32.totalorder %s434, %s450
      %p452 = scmp.eq.s32.totalorder %s50, 0
      %p453 = por %p451, %p452
      %s454 = ssub.s32 %s52, %s59
      %p455 = scmp.eq.s32.totalorder %s454, 0
      %s457 = sadd.s32 %s456, 1
      %s458 = scalar_select %p455, %s456, %s457
      %p461 = pneg %p455
      %p462 = scmp.eq.s32.totalorder %s44, 3
      %p463 = por %p461, %p462
      %p464 = scmp.ne.s32.totalorder %s456, %s459
      %p465 = scmp.eq.s32.totalorder %s44, 0
      %p466 = por %p464, %p465
      %p467 = scmp.ne.s32.totalorder %s456, %s459
      %p468 = scmp.eq.s32.totalorder %s49, 3
      %p469 = por %p467, %p468
      %p470 = scmp.ne.s32.totalorder %s459, %s460
      %p471 = scmp.eq.s32.totalorder %s49, 0
      %p472 = por %p470, %p471
      %p473 = scmp.ne.s32.totalorder %s459, %s460
      %p474 = scmp.eq.s32.totalorder %s50, 3
      %p475 = por %p473, %p474
      %p477 = scmp.ne.s32.totalorder %s460, %s476
      %p478 = scmp.eq.s32.totalorder %s50, 0
      %p479 = por %p477, %p478
      %s481 = sadd.s32 %s480, 1
      %p484 = scmp.eq.s32.totalorder %s44, 3
      %p485 = scmp.ne.s32.totalorder %s480, %s482
      %p486 = scmp.eq.s32.totalorder %s44, 0
      %p487 = por %p485, %p486
      %p488 = scmp.ne.s32.totalorder %s480, %s482
      %p489 = scmp.eq.s32.totalorder %s49, 3
      %p490 = por %p488, %p489
      %p491 = scmp.ne.s32.totalorder %s482, %s483
      %p492 = scmp.eq.s32.totalorder %s49, 0
      %p493 = por %p491, %p492
      %p494 = scmp.ne.s32.totalorder %s482, %s483
      %p495 = scmp.eq.s32.totalorder %s50, 3
      %p496 = por %p494, %p495
      %p498 = scmp.ne.s32.totalorder %s483, %s497
      %p499 = scmp.eq.s32.totalorder %s50, 0
      %p500 = por %p498, %p499
      %s502 = sadd.s32 %s501, 1
      %p505 = scmp.eq.s32.totalorder %s44, 3
      %p506 = scmp.ne.s32.totalorder %s501, %s503
      %p507 = scmp.eq.s32.totalorder %s44, 0
      %p508 = por %p506, %p507
      %p509 = scmp.ne.s32.totalorder %s501, %s503
      %p510 = scmp.eq.s32.totalorder %s49, 3
      %p511 = por %p509, %p510
      %p512 = scmp.ne.s32.totalorder %s503, %s504
      %p513 = scmp.eq.s32.totalorder %s49, 0
      %p514 = por %p512, %p513
      %p515 = scmp.ne.s32.totalorder %s503, %s504
      %p516 = scmp.eq.s32.totalorder %s50, 3
      %p517 = por %p515, %p516
      %p519 = scmp.ne.s32.totalorder %s504, %s518
      %p520 = scmp.eq.s32.totalorder %s50, 0
      %p521 = por %p519, %p520
      %s522 = ssub.s32 %s51, %s63
      %p523 = scmp.eq.s32.totalorder %s522, 0
      %s525 = sadd.s32 %s524, 1
      %s526 = scalar_select %p523, %s524, %s525
      %p529 = pneg %p523
      %p530 = scmp.eq.s32.totalorder %s44, 3
      %p531 = por %p529, %p530
      %p532 = scmp.ne.s32.totalorder %s524, %s527
      %p533 = scmp.eq.s32.totalorder %s44, 0
      %p534 = por %p532, %p533
      %p535 = scmp.ne.s32.totalorder %s524, %s527
      %p536 = scmp.eq.s32.totalorder %s49, 3
      %p537 = por %p535, %p536
      %p538 = scmp.ne.s32.totalorder %s527, %s528
      %p539 = scmp.eq.s32.totalorder %s49, 0
      %p540 = por %p538, %p539
      %p541 = scmp.ne.s32.totalorder %s527, %s528
      %p542 = scmp.eq.s32.totalorder %s50, 3
      %p543 = por %p541, %p542
      %p545 = scmp.ne.s32.totalorder %s528, %s544
      %p546 = scmp.eq.s32.totalorder %s50, 0
      %p547 = por %p545, %p546
      %s548 = ssub.s32 %s51, %s63
      %p549 = scmp.eq.s32.totalorder %s548, 0
      %s551 = sadd.s32 %s550, 1
      %s552 = scalar_select %p549, %s550, %s551
      %p555 = pneg %p549
      %p556 = scmp.eq.s32.totalorder %s44, 3
      %p557 = por %p555, %p556
      %p558 = scmp.ne.s32.totalorder %s550, %s553
      %p559 = scmp.eq.s32.totalorder %s44, 0
      %p560 = por %p558, %p559
      %p561 = scmp.ne.s32.totalorder %s550, %s553
      %p562 = scmp.eq.s32.totalorder %s49, 3
      %p563 = por %p561, %p562
      %p564 = scmp.ne.s32.totalorder %s553, %s554
      %p565 = scmp.eq.s32.totalorder %s49, 0
      %p566 = por %p564, %p565
      %p567 = scmp.ne.s32.totalorder %s553, %s554
      %p568 = scmp.eq.s32.totalorder %s50, 3
      %p569 = por %p567, %p568
      %p571 = scmp.ne.s32.totalorder %s554, %s570
      %p572 = scmp.eq.s32.totalorder %s50, 0
      %p573 = por %p571, %p572
      %p574 = scmp.le.s32.totalorder 1, %s44
      %p575 = scmp.lt.s32.totalorder %s44, 5
      %p576 = pnand %p574, %p575
      %p577 = pneg %p576
      // Predicated region
      $region9: #{tpu_custom_call.1} parent=5 // pred_check
        _
      $region10: #{tpu_custom_call.1} parent=5 // pred_check_branch
        %579 = sbr.rel (%p576) target = $region12
      $region11: #{tpu_custom_call.1} parent=5 // pred_region
        %s580 = ssub.s32 %s44, 1
        // Predicated region
        $region13: #{tpu_custom_call.1} parent=11 // pred_check
          %p581 = pneg %p493
        $region14: #{tpu_custom_call.1} parent=11 // pred_check_branch
          %583 = sbr.rel (%p581) target = $region16
        $region15: #{tpu_custom_call.1} parent=11 // pred_region
          _
        $region16: #{tpu_custom_call.1} parent=11 // pred_fallthru
          _
        // Predicated region
        $region17: #{tpu_custom_call.1} parent=11 // pred_check
          %p584 = pneg %p514
        $region18: #{tpu_custom_call.1} parent=11 // pred_check_branch
          %586 = sbr.rel (%p584) target = $region20
        $region19: #{tpu_custom_call.1} parent=11 // pred_region
          _
        $region20: #{tpu_custom_call.1} parent=11 // pred_fallthru
          _
      $region12: #{tpu_custom_call.1} parent=5 // pred_fallthru
        _
      %p587 = scmp.lt.s32.totalorder %s44, 4
      // Predicated region
      $region21: #{tpu_custom_call.1} parent=5 // pred_check
        %p588 = pneg %p587
      $region22: #{tpu_custom_call.1} parent=5 // pred_check_branch
        %590 = sbr.rel (%p588) target = $region24
      $region23: #{tpu_custom_call.1} parent=5 // pred_region
        // Predicated region
        $region25: #{tpu_custom_call.1} parent=23 // pred_check
          %p591 = pneg %p76
        $region26: #{tpu_custom_call.1} parent=23 // pred_check_branch
          %593 = sbr.rel (%p591) target = $region28
        $region27: #{tpu_custom_call.1} parent=23 // pred_region
          %s594 = sand.u32 %s66, 1
          %s595 = scalar_lea.sflag [#allocation4], %s594
          %s596 = sand.u32 %s66, 1
          %s597 = smul.addr %s596, 8
          %s598 = scalar_lea.vmem [#allocation3], %s597
          %600 = vsyncadd %s595, 0
          %s601 = smul.addr %s51, 8
          %s602 = scalar_lea.hbm %s0, %s601
          %s604 = sshll.u32 %s602, 4
          %s605 = int_to_ptr.hbm [resolvable:$true] %s604
          %s606 = sshll.u32 %s598, 4
          %s607 = int_to_ptr.vmem [resolvable:$true] %s606
          %609 = dma.hbm_to_vmem [thread:$0]  %s605, 128, %s607, %s595
        $region28: #{tpu_custom_call.1} parent=23 // pred_fallthru
          _
        // Predicated region
        $region29: #{tpu_custom_call.1} parent=23 // pred_check
          %p610 = pneg %p102
        $region30: #{tpu_custom_call.1} parent=23 // pred_check_branch
          %612 = sbr.rel (%p610) target = $region32
        $region31: #{tpu_custom_call.1} parent=23 // pred_region
          %p613 = scmp.lt.s32.totalorder %s51, 1
          %s614 = scalar_select %p613, %s51, 1
          %s615 = smul.addr %s614, 2
          %s616 = smul.addr %s615, 8
          %s617 = scalar_lea.vmem %s1, %s616
        $region32: #{tpu_custom_call.1} parent=23 // pred_fallthru
          _
        // Predicated region
        $region33: #{tpu_custom_call.1} parent=23 // pred_check
          %p618 = pneg %p128
        $region34: #{tpu_custom_call.1} parent=23 // pred_check_branch
          %620 = sbr.rel (%p618) target = $region36
        $region35: #{tpu_custom_call.1} parent=23 // pred_region
          %p621 = scmp.lt.s32.totalorder %s52, 1
          %s622 = scalar_select %p621, %s52, 1
          %s623 = smul.addr %s622, 4
          %s624 = smul.addr %s623, 4
          %s625 = scalar_lea.vmem %s2, %s624
        $region36: #{tpu_custom_call.1} parent=23 // pred_fallthru
          _
        // Predicated region
        $region37: #{tpu_custom_call.1} parent=23 // pred_check
          %p626 = pneg %p154
        $region38: #{tpu_custom_call.1} parent=23 // pred_check_branch
          %628 = sbr.rel (%p626) target = $region40
        $region39: #{tpu_custom_call.1} parent=23 // pred_region
          %s629 = sand.u32 %s44, 1
          %s630 = scalar_lea.sflag [#allocation7], %s629
          %s631 = sand.u32 %s144, 1
          %s632 = scalar_lea.vmem [#allocation6], %s631
          %634 = vsyncadd %s630, 0
          %s635 = scalar_lea.hbm %s3, %s52
          %s637 = sshll.u32 %s635, 4
          %s638 = int_to_ptr.hbm [resolvable:$true] %s637
          %s639 = sshll.u32 %s632, 4
          %s640 = int_to_ptr.vmem [resolvable:$true] %s639
          %642 = dma.hbm_to_vmem [thread:$0]  %s638, 16, %s640, %s630
        $region40: #{tpu_custom_call.1} parent=23 // pred_fallthru
          _
        // Predicated region
        $region41: #{tpu_custom_call.1} parent=23 // pred_check
          %p643 = pneg %p180
        $region42: #{tpu_custom_call.1} parent=23 // pred_check_branch
          %645 = sbr.rel (%p643) target = $region44
        $region43: #{tpu_custom_call.1} parent=23 // pred_region
          %p646 = scmp.lt.s32.totalorder %s52, 1
          %s647 = scalar_select %p646, %s52, 1
          %s648 = smul.addr %s647, 4
          %s649 = smul.addr %s648, 4
          %s650 = scalar_lea.vmem %s4, %s649
        $region44: #{tpu_custom_call.1} parent=23 // pred_fallthru
          _
        // Predicated region
        $region45: #{tpu_custom_call.1} parent=23 // pred_check
          %p651 = pneg %p206
        $region46: #{tpu_custom_call.1} parent=23 // pred_check_branch
          %653 = sbr.rel (%p651) target = $region48
        $region47: #{tpu_custom_call.1} parent=23 // pred_region
          %p654 = scmp.lt.s32.totalorder %s52, 1
          %s655 = scalar_select %p654, %s52, 1
          %s656 = scalar_lea.vmem %s5, %s655
        $region48: #{tpu_custom_call.1} parent=23 // pred_fallthru
          _
        // Predicated region
        $region49: #{tpu_custom_call.1} parent=23 // pred_check
          %p657 = pneg %p232
        $region50: #{tpu_custom_call.1} parent=23 // pred_check_branch
          %659 = sbr.rel (%p657) target = $region52
        $region51: #{tpu_custom_call.1} parent=23 // pred_region
          %s660 = sand.u32 %s44, 1
          %s661 = scalar_lea.sflag [#allocation7], %s660
          %s662 = sand.u32 %s222, 1
          %s663 = smul.addr %s662, 16
          %s664 = scalar_lea.vmem [#allocation8], %s663
          %666 = vsyncadd %s661, 0
          %s667 = smul.addr %s52, 4
          %s668 = smul.addr %s667, 4
          %s669 = scalar_lea.hbm %s6, %s668
          %s670 = sshll.u32 %s669, 4
          %s671 = int_to_ptr.hbm [resolvable:$true] %s670
          %s672 = sshll.u32 %s664, 4
          %s673 = int_to_ptr.vmem [resolvable:$true] %s672
          %678 = dma.hbm_to_vmem [thread:$0]  %s671, 256, %s673, %s661, 64, 64, 4
        $region52: #{tpu_custom_call.1} parent=23 // pred_fallthru
          _
        // Predicated region
        $region53: #{tpu_custom_call.1} parent=23 // pred_check
          %p679 = pneg %p258
        $region54: #{tpu_custom_call.1} parent=23 // pred_check_branch
          %681 = sbr.rel (%p679) target = $region56
        $region55: #{tpu_custom_call.1} parent=23 // pred_region
          %p682 = scmp.lt.s32.totalorder %s52, 1
          %s683 = scalar_select %p682, %s52, 1
          %s684 = scalar_lea.vmem %s7, %s683
        $region56: #{tpu_custom_call.1} parent=23 // pred_fallthru
          _
        // Predicated region
        $region57: #{tpu_custom_call.1} parent=23 // pred_check
          %p685 = pneg %p284
        $region58: #{tpu_custom_call.1} parent=23 // pred_check_branch
          %687 = sbr.rel (%p685) target = $region60
        $region59: #{tpu_custom_call.1} parent=23 // pred_region
          %s688 = sand.u32 %s44, 1
          %s689 = scalar_lea.sflag [#allocation10], %s688
          %s690 = sand.u32 %s274, 1
          %s691 = smul.addr %s690, 16
          %s692 = scalar_lea.vmem [#allocation9], %s691
          %694 = vsyncadd %s689, 0
          %s695 = smul.addr %s52, 4
          %s696 = smul.addr %s695, 4
          %s697 = scalar_lea.hbm %s8, %s696
          %s698 = sshll.u32 %s697, 4
          %s699 = int_to_ptr.hbm [resolvable:$true] %s698
          %s700 = sshll.u32 %s692, 4
          %s701 = int_to_ptr.vmem [resolvable:$true] %s700
          %706 = dma.hbm_to_vmem [thread:$0]  %s699, 256, %s701, %s689, 64, 64, 4
        $region60: #{tpu_custom_call.1} parent=23 // pred_fallthru
          _
        // Predicated region
        $region61: #{tpu_custom_call.1} parent=23 // pred_check
          %p707 = pneg %p310
        $region62: #{tpu_custom_call.1} parent=23 // pred_check_branch
          %709 = sbr.rel (%p707) target = $region64
        $region63: #{tpu_custom_call.1} parent=23 // pred_region
          %p710 = scmp.lt.s32.totalorder %s52, 1
          %s711 = scalar_select %p710, %s52, 1
          %s712 = scalar_lea.vmem %s9, %s711
        $region64: #{tpu_custom_call.1} parent=23 // pred_fallthru
          _
        // Predicated region
        $region65: #{tpu_custom_call.1} parent=23 // pred_check
          %p713 = pneg %p336
        $region66: #{tpu_custom_call.1} parent=23 // pred_check_branch
          %715 = sbr.rel (%p713) target = $region68
        $region67: #{tpu_custom_call.1} parent=23 // pred_region
          %p716 = scmp.lt.s32.totalorder %s52, 1
          %s717 = scalar_select %p716, %s52, 1
          %s718 = smul.addr %s717, 8
          %s719 = smul.addr %s718, 4
          %s720 = scalar_lea.vmem %s10, %s719
        $region68: #{tpu_custom_call.1} parent=23 // pred_fallthru
          _
        // Predicated region
        $region69: #{tpu_custom_call.1} parent=23 // pred_check
          %p721 = pneg %p362
        $region70: #{tpu_custom_call.1} parent=23 // pred_check_branch
          %723 = sbr.rel (%p721) target = $region72
        $region71: #{tpu_custom_call.1} parent=23 // pred_region
          %p724 = scmp.lt.s32.totalorder %s52, 1
          %s725 = scalar_select %p724, %s52, 1
          %s726 = scalar_lea.vmem %s11, %s725
        $region72: #{tpu_custom_call.1} parent=23 // pred_fallthru
          _
        // Predicated region
        $region73: #{tpu_custom_call.1} parent=23 // pred_check
          %p727 = pneg %p388
        $region74: #{tpu_custom_call.1} parent=23 // pred_check_branch
          %729 = sbr.rel (%p727) target = $region76
        $region75: #{tpu_custom_call.1} parent=23 // pred_region
          %p730 = scmp.lt.s32.totalorder %s52, 1
          %s731 = scalar_select %p730, %s52, 1
          %s732 = scalar_lea.vmem %s12, %s731
        $region76: #{tpu_custom_call.1} parent=23 // pred_fallthru
          _
        // Predicated region
        $region77: #{tpu_custom_call.1} parent=23 // pred_check
          %p733 = pneg %p414
        $region78: #{tpu_custom_call.1} parent=23 // pred_check_branch
          %735 = sbr.rel (%p733) target = $region80
        $region79: #{tpu_custom_call.1} parent=23 // pred_region
          %s736 = sand.u32 %s44, 1
          %s737 = scalar_lea.sflag [#allocation10], %s736
          %s738 = sand.u32 %s404, 1
          %s739 = scalar_lea.vmem [#allocation11], %s738
          %741 = vsyncadd %s737, 0
          %s742 = scalar_lea.hbm %s13, %s52
          %s744 = sshll.u32 %s742, 4
          %s745 = int_to_ptr.hbm [resolvable:$true] %s744
          %s746 = sshll.u32 %s739, 4
          %s747 = int_to_ptr.vmem [resolvable:$true] %s746
          %749 = dma.hbm_to_vmem [thread:$0]  %s745, 16, %s747, %s737
        $region80: #{tpu_custom_call.1} parent=23 // pred_fallthru
          _
        // Predicated region
        $region81: #{tpu_custom_call.1} parent=23 // pred_check
          %p750 = pneg %p440
        $region82: #{tpu_custom_call.1} parent=23 // pred_check_branch
          %752 = sbr.rel (%p750) target = $region84
        $region83: #{tpu_custom_call.1} parent=23 // pred_region
          %p753 = scmp.lt.s32.totalorder %s52, 1
          %s754 = scalar_select %p753, %s52, 1
          %s755 = scalar_lea.vmem %s14, %s754
        $region84: #{tpu_custom_call.1} parent=23 // pred_fallthru
          _
        // Predicated region
        $region85: #{tpu_custom_call.1} parent=23 // pred_check
          %p756 = pneg %p466
        $region86: #{tpu_custom_call.1} parent=23 // pred_check_branch
          %758 = sbr.rel (%p756) target = $region88
        $region87: #{tpu_custom_call.1} parent=23 // pred_region
          %s759 = sand.u32 %s456, 1
          %s760 = scalar_lea.sflag [#allocation13], %s759
          %s761 = sand.u32 %s456, 1
          %s762 = scalar_lea.vmem [#allocation12], %s761
          %764 = vsyncadd %s760, 0
          %s765 = scalar_lea.hbm %s15, %s52
          %s767 = sshll.u32 %s765, 4
          %s768 = int_to_ptr.hbm [resolvable:$true] %s767
          %s769 = sshll.u32 %s762, 4
          %s770 = int_to_ptr.vmem [resolvable:$true] %s769
          %772 = dma.hbm_to_vmem [thread:$0]  %s768, 16, %s770, %s760
        $region88: #{tpu_custom_call.1} parent=23 // pred_fallthru
          _
      $region24: #{tpu_custom_call.1} parent=5 // pred_fallthru
        _
      %p773 = scmp.le.s32.totalorder 1, %s44
      %p774 = scmp.lt.s32.totalorder %s44, 5
      %p775 = pnand %p773, %p774
      %p776 = pneg %p775
      // Predicated region
      $region89: #{tpu_custom_call.1} parent=5 // pred_check
        _
      $region90: #{tpu_custom_call.1} parent=5 // pred_check_branch
        %778 = sbr.rel (%p775) target = $region92
      $region91: #{tpu_custom_call.1} parent=5 // pred_region
        %s779 = ssub.s32 %s44, 1
        %s780 = sand.u32 %s69, 1
        %s781 = scalar_lea.sflag [#allocation4], %s780
        %s782 = sand.u32 %s69, 1
        %s783 = smul.addr %s782, 8
        %s784 = scalar_lea.vmem [#allocation3], %s783
        // Predicated region
        $region93: #{tpu_custom_call.1} parent=91 // pred_check
          %p785 = pneg %p82
        $region94: #{tpu_custom_call.1} parent=91 // pred_check_branch
          %787 = sbr.rel (%p785) target = $region96
        $region95: #{tpu_custom_call.1} parent=91 // pred_region
          %789 = dma.done %s781, 128
        $region96: #{tpu_custom_call.1} parent=91 // pred_fallthru
          _
        %s790 = sand.u32 %s49, 1
        %s791 = scalar_lea.sflag [#allocation7], %s790
        %s792 = sand.u32 %s147, 1
        %s793 = scalar_lea.vmem [#allocation6], %s792
        // Predicated region
        $region97: #{tpu_custom_call.1} parent=91 // pred_check
          %p794 = pneg %p160
        $region98: #{tpu_custom_call.1} parent=91 // pred_check_branch
          %796 = sbr.rel (%p794) target = $region100
        $region99: #{tpu_custom_call.1} parent=91 // pred_region
          %798 = dma.done %s791, 16
        $region100: #{tpu_custom_call.1} parent=91 // pred_fallthru
          _
        %s799 = sand.u32 %s49, 1
        %s800 = scalar_lea.sflag [#allocation7], %s799
        %s801 = sand.u32 %s225, 1
        %s802 = smul.addr %s801, 16
        %s803 = scalar_lea.vmem [#allocation8], %s802
        // Predicated region
        $region101: #{tpu_custom_call.1} parent=91 // pred_check
          %p804 = pneg %p238
        $region102: #{tpu_custom_call.1} parent=91 // pred_check_branch
          %806 = sbr.rel (%p804) target = $region104
        $region103: #{tpu_custom_call.1} parent=91 // pred_region
          %808 = dma.done %s800, 256
        $region104: #{tpu_custom_call.1} parent=91 // pred_fallthru
          _
        %s809 = sand.u32 %s49, 1
        %s810 = scalar_lea.sflag [#allocation10], %s809
        %s811 = sand.u32 %s277, 1
        %s812 = smul.addr %s811, 16
        %s813 = scalar_lea.vmem [#allocation9], %s812
        // Predicated region
        $region105: #{tpu_custom_call.1} parent=91 // pred_check
          %p814 = pneg %p290
        $region106: #{tpu_custom_call.1} parent=91 // pred_check_branch
          %816 = sbr.rel (%p814) target = $region108
        $region107: #{tpu_custom_call.1} parent=91 // pred_region
          %818 = dma.done %s810, 256
        $region108: #{tpu_custom_call.1} parent=91 // pred_fallthru
          _
        %s819 = sand.u32 %s49, 1
        %s820 = scalar_lea.sflag [#allocation10], %s819
        %s821 = sand.u32 %s407, 1
        %s822 = scalar_lea.vmem [#allocation11], %s821
        // Predicated region
        $region109: #{tpu_custom_call.1} parent=91 // pred_check
          %p823 = pneg %p420
        $region110: #{tpu_custom_call.1} parent=91 // pred_check_branch
          %825 = sbr.rel (%p823) target = $region112
        $region111: #{tpu_custom_call.1} parent=91 // pred_region
          %827 = dma.done %s820, 16
        $region112: #{tpu_custom_call.1} parent=91 // pred_fallthru
          _
        %s828 = sand.u32 %s459, 1
        %s829 = scalar_lea.sflag [#allocation13], %s828
        %s830 = sand.u32 %s459, 1
        %s831 = scalar_lea.vmem [#allocation12], %s830
        // Predicated region
        $region113: #{tpu_custom_call.1} parent=91 // pred_check
          %p832 = pneg %p472
        $region114: #{tpu_custom_call.1} parent=91 // pred_check_branch
          %834 = sbr.rel (%p832) target = $region116
        $region115: #{tpu_custom_call.1} parent=91 // pred_region
          %836 = dma.done %s829, 16
        $region116: #{tpu_custom_call.1} parent=91 // pred_fallthru
          _
        %s837 = sand.u32 %s69, 1
        %s838 = scalar_lea.sflag [#allocation4], %s837
        %s839 = sand.u32 %s69, 1
        %s840 = smul.addr %s839, 8
        %s841 = scalar_lea.vmem [#allocation3], %s840
        %p842 = pneg %p82
        %p843 = pneg %p79
        %p844 = scmp.lt.s32.totalorder %s53, 1
        %s845 = scalar_select %p844, %s53, 1
        %s846 = smul.addr %s845, 2
        %s847 = smul.addr %s846, 8
        %s848 = scalar_lea.vmem %s1, %s847
        %p849 = pneg %p108
        %p850 = pneg %p105
        %p851 = scmp.lt.s32.totalorder %s54, 1
        %s852 = scalar_select %p851, %s54, 1
        %s853 = smul.addr %s852, 4
        %s854 = smul.addr %s853, 4
        %s855 = scalar_lea.vmem %s2, %s854
        %p856 = pneg %p134
        %p857 = pneg %p131
        %s858 = sand.u32 %s49, 1
        %s859 = scalar_lea.sflag [#allocation7], %s858
        %s860 = sand.u32 %s147, 1
        %s861 = scalar_lea.vmem [#allocation6], %s860
        %p862 = pneg %p160
        %p863 = pneg %p157
        %p864 = scmp.lt.s32.totalorder %s54, 1
        %s865 = scalar_select %p864, %s54, 1
        %s866 = smul.addr %s865, 4
        %s867 = smul.addr %s866, 4
        %s868 = scalar_lea.vmem %s4, %s867
        %p869 = pneg %p186
        %p870 = pneg %p183
        %p871 = scmp.lt.s32.totalorder %s54, 1
        %s872 = scalar_select %p871, %s54, 1
        %s873 = scalar_lea.vmem %s5, %s872
        %p874 = pneg %p212
        %p875 = pneg %p209
        %s876 = sand.u32 %s49, 1
        %s877 = scalar_lea.sflag [#allocation7], %s876
        %s878 = sand.u32 %s225, 1
        %s879 = smul.addr %s878, 16
        %s880 = scalar_lea.vmem [#allocation8], %s879
        %p881 = pneg %p238
        %p882 = pneg %p235
        %p883 = scmp.lt.s32.totalorder %s54, 1
        %s884 = scalar_select %p883, %s54, 1
        %s885 = scalar_lea.vmem %s7, %s884
        %p886 = pneg %p264
        %p887 = pneg %p261
        %s888 = sand.u32 %s49, 1
        %s889 = scalar_lea.sflag [#allocation10], %s888
        %s890 = sand.u32 %s277, 1
        %s891 = smul.addr %s890, 16
        %s892 = scalar_lea.vmem [#allocation9], %s891
        %p893 = pneg %p290
        %p894 = pneg %p287
        %p895 = scmp.lt.s32.totalorder %s54, 1
        %s896 = scalar_select %p895, %s54, 1
        %s897 = scalar_lea.vmem %s9, %s896
        %p898 = pneg %p316
        %p899 = pneg %p313
        %p900 = scmp.lt.s32.totalorder %s54, 1
        %s901 = scalar_select %p900, %s54, 1
        %s902 = smul.addr %s901, 8
        %s903 = smul.addr %s902, 4
        %s904 = scalar_lea.vmem %s10, %s903
        %p905 = pneg %p342
        %p906 = pneg %p339
        %p907 = scmp.lt.s32.totalorder %s54, 1
        %s908 = scalar_select %p907, %s54, 1
        %s909 = scalar_lea.vmem %s11, %s908
        %p910 = pneg %p368
        %p911 = pneg %p365
        %p912 = scmp.lt.s32.totalorder %s54, 1
        %s913 = scalar_select %p912, %s54, 1
        %s914 = scalar_lea.vmem %s12, %s913
        %p915 = pneg %p394
        %p916 = pneg %p391
        %s917 = sand.u32 %s49, 1
        %s918 = scalar_lea.sflag [#allocation10], %s917
        %s919 = sand.u32 %s407, 1
        %s920 = scalar_lea.vmem [#allocation11], %s919
        %p921 = pneg %p420
        %p922 = pneg %p417
        %p923 = scmp.lt.s32.totalorder %s54, 1
        %s924 = scalar_select %p923, %s54, 1
        %s925 = scalar_lea.vmem %s14, %s924
        %p926 = pneg %p446
        %p927 = pneg %p443
        %s928 = sand.u32 %s459, 1
        %s929 = scalar_lea.sflag [#allocation13], %s928
        %s930 = sand.u32 %s459, 1
        %s931 = scalar_lea.vmem [#allocation12], %s930
        %p932 = pneg %p472
        %p933 = pneg %p469
        %p934 = pneg %p493
        %p935 = pneg %p490
        %p936 = pneg %p514
        %p937 = pneg %p511
        %p938 = pneg %p540
        %p939 = pneg %p537
        %s940 = sand.u32 %s527, 1
        %s941 = scalar_lea.sflag [#allocation5], %s940
        %s942 = sand.u32 %s527, 1
        %s943 = smul.addr %s942, 8
        %s944 = scalar_lea.vmem [#allocation14], %s943
        %p945 = pneg %p566
        %p946 = pneg %p563
        %s947 = sand.u32 %s553, 1
        %s948 = scalar_lea.sflag [#allocation16], %s947
        %s949 = sand.u32 %s553, 1
        %s950 = smul.addr %s949, 8
        %s951 = scalar_lea.vmem [#allocation15], %s950
        %p952 = scmp.lt.s32.totalorder %s53, 1
        %s953 = scalar_select %p952, %s53, 1
        %s954 = smul.addr %s953, 2
        %s955 = smul.addr %s954, 8
        %s956 = scalar_lea.vmem %s1, %s955
        %p957 = scmp.lt.s32.totalorder %s54, 1
        %s958 = scalar_select %p957, %s54, 1
        %s959 = smul.addr %s958, 4
        %s960 = smul.addr %s959, 4
        %s961 = scalar_lea.vmem %s2, %s960
        %p962 = scmp.lt.s32.totalorder %s54, 1
        %s963 = scalar_select %p962, %s54, 1
        %s964 = smul.addr %s963, 4
        %s965 = smul.addr %s964, 4
        %s966 = scalar_lea.vmem %s4, %s965
        %p967 = scmp.lt.s32.totalorder %s54, 1
        %s968 = scalar_select %p967, %s54, 1
        %s969 = scalar_lea.vmem %s5, %s968
        %p970 = scmp.lt.s32.totalorder %s54, 1
        %s971 = scalar_select %p970, %s54, 1
        %s972 = scalar_lea.vmem %s7, %s971
        %p973 = scmp.lt.s32.totalorder %s54, 1
        %s974 = scalar_select %p973, %s54, 1
        %s975 = scalar_lea.vmem %s9, %s974
        %p976 = scmp.lt.s32.totalorder %s54, 1
        %s977 = scalar_select %p976, %s54, 1
        %s978 = smul.addr %s977, 8
        %s979 = smul.addr %s978, 4
        %s980 = scalar_lea.vmem %s10, %s979
        %p981 = scmp.lt.s32.totalorder %s54, 1
        %s982 = scalar_select %p981, %s54, 1
        %s983 = scalar_lea.vmem %s11, %s982
        %p984 = scmp.lt.s32.totalorder %s54, 1
        %s985 = scalar_select %p984, %s54, 1
        %s986 = scalar_lea.vmem %s12, %s985
        %p987 = scmp.lt.s32.totalorder %s54, 1
        %s988 = scalar_select %p987, %s54, 1
        %s989 = scalar_lea.vmem %s14, %s988
        %p991 = scmp.eq.s32.totalorder %s54, 0
        // Predicated region
        $region117: #{tpu_custom_call.1} parent=91 // pred_check
          %p992 = pneg %p991
        $region118: #{tpu_custom_call.1} parent=91 // pred_check_branch
          %994 = sbr.rel (%p992) target = $region120
        $region119: #{tpu_custom_call.1} parent=91 // pred_region
          %v995 = vld [vmem:[%s784] sm:$0xff]
          %vm996 = vcmask 261120
          %997 = vst.msk [vmem:[#allocation2] sm:$0xff] %vm996, %v995
        $region120: #{tpu_custom_call.1} parent=91 // pred_fallthru
          _
        %v998 = vld [vmem:[#allocation2] sm:$0xff]
        %v999 = vld [vmem:[%s956] sm:$0xff]
        %v1000 = vld [vmem:[%s956 + $0x8] sm:$0xff]
        %v1001 = vpack.c.bf16 %v998, %v998
        %v1002 = vld [vmem:[%s961] sm:$0xf]
        %v1003 = vld [vmem:[%s961 + $0x4] sm:$0xf]
        %v1004 = vld [vmem:[%s961 + $0x8] sm:$0xf]
        %v1005 = vld [vmem:[%s961 + $0xc] sm:$0xf]
        %v1006 = vld [vmem:[%s793] sm:$0x1]
        %v1008 = vperm.slane %v1006, 0
        %v1014 = vunpack.c.l.b16 %v1002
        %v1015 = vunpack.c.l.b16 %v1003
        %v1016 = vunpack.c.l.b16 %v1004
        %v1017 = vunpack.c.l.b16 %v1005
        %v1018 = vpack.c.b16 %v1015, %v1014
        %v1019 = vpack.c.b16 %v1017, %v1016
        %vm1022 = vcmask 261120
        %v1024 = vsel %vm1022, %v1001, 0
        %1026 = vmatpush.bf16.msra.mxu0 0
        %1027 = vmatpush.bf16.msra.mxu0 0
        %1028 = vmatpush.bf16.msra.mxu0 0
        %1029 = vmatpush.bf16.msra.mxu0 0
        %1030 = vmatpush.bf16.msra.mxu0 0
        %1031 = vmatpush.bf16.msra.mxu0 0
        %1032 = vmatpush.bf16.msra.mxu0 %v1019
        %1033 = vmatpush.bf16.msra.mxu0 %v1018
        %1034 = vmatmul.bf16.gmra.mxu0 %v1024
        %v1035 = vpop.f32.mrf.mxu0
        %v1036 = vadd.f32 %v1008, %v1035
        %v1037 = vpop.f32.mrf.mxu0
        %1038 = vdwg.mxu0
        %v1039 = vmul.f32 %v1036, 0.35355338
        %v1040 = vpack.c.bf16 %v1000, %v999
        %v1041 = vld [vmem:[%s966] sm:$0xf]
        %v1042 = vld [vmem:[%s966 + $0x4] sm:$0xf]
        %v1043 = vld [vmem:[%s966 + $0x8] sm:$0xf]
        %v1044 = vld [vmem:[%s966 + $0xc] sm:$0xf]
        %v1045 = vld [vmem:[%s969] sm:$0x1]
        %v1047 = vperm.slane %v1045, 0
        %v1053 = vunpack.c.l.b16 %v1041
        %v1054 = vunpack.c.l.b16 %v1042
        %v1055 = vunpack.c.l.b16 %v1043
        %v1056 = vunpack.c.l.b16 %v1044
        %v1057 = vpack.c.b16 %v1054, %v1053
        %v1058 = vpack.c.b16 %v1056, %v1055
        %v1062 = vsel %vm1022, %v1040, 0
        %1064 = vmatpush.bf16.msra.mxu0 0
        %1065 = vmatpush.bf16.msra.mxu0 0
        %1066 = vmatpush.bf16.msra.mxu0 0
        %1067 = vmatpush.bf16.msra.mxu0 0
        %1068 = vmatpush.bf16.msra.mxu0 0
        %1069 = vmatpush.bf16.msra.mxu0 0
        %1070 = vmatpush.bf16.msra.mxu0 %v1058
        %1071 = vmatpush.bf16.msra.mxu0 %v1057
        %1072 = vmatmul.bf16.gmra.mxu0 %v1062
        %v1073 = vpop.f32.mrf.mxu0
        %v1074 = vadd.f32 %v1047, %v1073
        %v1075 = vpop.f32.mrf.mxu0
        %v1076 = vadd.f32 %v1047, %v1075
        %1077 = vdwg.mxu0
        %1079 = vrot.lane.b32.xlu0 %v1039, 120
        %v1080 = vpop.permute.xlu0 %1079
        %1082 = vrot.lane.b32.xlu0 %v1039, 112
        %v1083 = vpop.permute.xlu0 %1082
        %1085 = vrot.lane.b32.xlu0 %v1039, 104
        %v1086 = vpop.permute.xlu0 %1085
        %v1088 = vpack.c.bf16 %v1039, %v1039
        %v1089 = vpack.c.bf16 %v1080, %v1080
        %v1090 = vpack.c.bf16 %v1083, %v1083
        %v1091 = vpack.c.bf16 %v1086, %v1086
        %1094 = vrot.lane.b32.xlu0 %v1074, 120
        %v1095 = vpop.permute.xlu0 %1094
        %1096 = vrot.lane.b32.xlu0 %v1076, 120
        %v1097 = vpop.permute.xlu0 %1096
        %1100 = vrot.lane.b32.xlu0 %v1074, 112
        %v1101 = vpop.permute.xlu0 %1100
        %1102 = vrot.lane.b32.xlu0 %v1076, 112
        %v1103 = vpop.permute.xlu0 %1102
        %1106 = vrot.lane.b32.xlu0 %v1074, 104
        %v1107 = vpop.permute.xlu0 %1106
        %1108 = vrot.lane.b32.xlu0 %v1076, 104
        %v1109 = vpop.permute.xlu0 %1108
        %v1112 = vpack.c.bf16 %v1074, %v1074
        %v1113 = vpack.c.bf16 %v1076, %v1076
        %v1114 = vpack.c.bf16 %v1095, %v1095
        %v1115 = vpack.c.bf16 %v1097, %v1097
        %v1116 = vpack.c.bf16 %v1101, %v1101
        %v1117 = vpack.c.bf16 %v1103, %v1103
        %v1118 = vpack.c.bf16 %v1107, %v1107
        %v1119 = vpack.c.bf16 %v1109, %v1109
        %v1122 = vunpack.c.l.b16 %v1112
        %v1123 = vunpack.c.l.b16 %v1113
        %v1124 = vpack.c.b16 %v1123, %v1122
        %vm1125 = vcmask 64512
        %v1127 = vsel %vm1125, %v1088, 0
        %v1130 = vsel %vm1125, %v1124, 0
        %1132 = vmatpush.bf16.xpose.msra.mxu0 0
        %1133 = vmatpush.bf16.xpose.msra.mxu0 0
        %1134 = vmatpush.bf16.xpose.msra.mxu0 0
        %1135 = vmatpush.bf16.xpose.msra.mxu0 0
        %1136 = vmatpush.bf16.xpose.msra.mxu0 0
        %1137 = vmatpush.bf16.xpose.msra.mxu0 0
        %1138 = vmatpush.bf16.xpose.msra.mxu0 0
        %1139 = vmatpush.bf16.xpose.msra.mxu0 %v1130
        %1140 = vmatmul.bf16.gmra.mxu0 %v1127
        %v1141 = vpop.f32.mrf.mxu0
        %v1142 = vadd.f32 0.0, %v1141
        %v1143 = vpop.f32.mrf.mxu0
        %1144 = vdwg.mxu0
        %v1147 = vunpack.c.l.b16 %v1114
        %v1148 = vunpack.c.l.b16 %v1115
        %v1149 = vpack.c.b16 %v1148, %v1147
        %v1151 = vsel %vm1125, %v1089, 0
        %v1154 = vsel %vm1125, %v1149, 0
        %1156 = vmatpush.bf16.xpose.msra.mxu0 0
        %1157 = vmatpush.bf16.xpose.msra.mxu0 0
        %1158 = vmatpush.bf16.xpose.msra.mxu0 0
        %1159 = vmatpush.bf16.xpose.msra.mxu0 0
        %1160 = vmatpush.bf16.xpose.msra.mxu0 0
        %1161 = vmatpush.bf16.xpose.msra.mxu0 0
        %1162 = vmatpush.bf16.xpose.msra.mxu0 0
        %1163 = vmatpush.bf16.xpose.msra.mxu0 %v1154
        %1164 = vmatmul.bf16.gmra.mxu0 %v1151
        %v1165 = vpop.f32.mrf.mxu0
        %v1166 = vadd.f32 0.0, %v1165
        %v1167 = vpop.f32.mrf.mxu0
        %1168 = vdwg.mxu0
        %v1171 = vunpack.c.l.b16 %v1116
        %v1172 = vunpack.c.l.b16 %v1117
        %v1173 = vpack.c.b16 %v1172, %v1171
        %v1175 = vsel %vm1125, %v1090, 0
        %v1178 = vsel %vm1125, %v1173, 0
        %1180 = vmatpush.bf16.xpose.msra.mxu0 0
        %1181 = vmatpush.bf16.xpose.msra.mxu0 0
        %1182 = vmatpush.bf16.xpose.msra.mxu0 0
        %1183 = vmatpush.bf16.xpose.msra.mxu0 0
        %1184 = vmatpush.bf16.xpose.msra.mxu0 0
        %1185 = vmatpush.bf16.xpose.msra.mxu0 0
        %1186 = vmatpush.bf16.xpose.msra.mxu0 0
        %1187 = vmatpush.bf16.xpose.msra.mxu0 %v1178
        %1188 = vmatmul.bf16.gmra.mxu0 %v1175
        %v1189 = vpop.f32.mrf.mxu0
        %v1190 = vadd.f32 0.0, %v1189
        %v1191 = vpop.f32.mrf.mxu0
        %1192 = vdwg.mxu0
        %v1195 = vunpack.c.l.b16 %v1118
        %v1196 = vunpack.c.l.b16 %v1119
        %v1197 = vpack.c.b16 %v1196, %v1195
        %v1199 = vsel %vm1125, %v1091, 0
        %v1202 = vsel %vm1125, %v1197, 0
        %1204 = vmatpush.bf16.xpose.msra.mxu0 0
        %1205 = vmatpush.bf16.xpose.msra.mxu0 0
        %1206 = vmatpush.bf16.xpose.msra.mxu0 0
        %1207 = vmatpush.bf16.xpose.msra.mxu0 0
        %1208 = vmatpush.bf16.xpose.msra.mxu0 0
        %1209 = vmatpush.bf16.xpose.msra.mxu0 0
        %1210 = vmatpush.bf16.xpose.msra.mxu0 0
        %1211 = vmatpush.bf16.xpose.msra.mxu0 %v1202
        %1212 = vmatmul.bf16.gmra.mxu0 %v1199
        %v1213 = vpop.f32.mrf.mxu0
        %v1214 = vadd.f32 0.0, %v1213
        %v1215 = vpop.f32.mrf.mxu0
        %1216 = vdwg.mxu0
        %vm1217 = vcmask 130048
        %v1218 = vsel %vm1217, %v1142, -inf
        %1219 = vmax.xlane.f32.xlu0 %v1218
        %v1220 = vpop.xlane.xlu0 %1219
        %v1221 = vsel %vm1217, %v1166, -inf
        %1222 = vmax.xlane.f32.xlu0 %v1221
        %v1223 = vpop.xlane.xlu0 %1222
        %v1224 = vsel %vm1217, %v1190, -inf
        %1225 = vmax.xlane.f32.xlu0 %v1224
        %v1226 = vpop.xlane.xlu0 %1225
        %v1227 = vsel %vm1217, %v1214, -inf
        %1228 = vmax.xlane.f32.xlu0 %v1227
        %v1229 = vpop.xlane.xlu0 %1228
        %v1230 = vsub.f32 %v1142, %v1220
        %v1231 = vsub.f32 %v1166, %v1223
        %v1232 = vsub.f32 %v1190, %v1226
        %v1233 = vsub.f32 %v1214, %v1229
        %v1234 = vmul.f32 %v1230, 1.442695
        %v1235 = vpow.pop %v1234
        %v1236 = vmul.f32 %v1231, 1.442695
        %v1237 = vpow.pop %v1236
        %v1238 = vmul.f32 %v1232, 1.442695
        %v1239 = vpow.pop %v1238
        %v1240 = vmul.f32 %v1233, 1.442695
        %v1241 = vpow.pop %v1240
        %v1242 = vsel %vm1217, %v1235, 0.0
        %1243 = vadd.xlane.f32.xlu0 %v1242
        %v1244 = vpop.xlane.xlu0 %1243
        %v1245 = vsel %vm1217, %v1237, 0.0
        %1246 = vadd.xlane.f32.xlu0 %v1245
        %v1247 = vpop.xlane.xlu0 %1246
        %v1248 = vsel %vm1217, %v1239, 0.0
        %1249 = vadd.xlane.f32.xlu0 %v1248
        %v1250 = vpop.xlane.xlu0 %1249
        %v1251 = vsel %vm1217, %v1241, 0.0
        %1252 = vadd.xlane.f32.xlu0 %v1251
        %v1253 = vpop.xlane.xlu0 %1252
        %v1254 = vrcp.pop %v1244
        %v1255 = vmul.f32 %v1244, %v1254
        %v1256 = vsub.f32 1.0, %v1255
        %v1257 = vmul.f32 %v1254, %v1256
        %v1258 = vadd.f32 %v1254, %v1257
        %vm1259 = vweird.f32 %v1244
        %vm1260 = vweird.f32 %v1254
        %vm1261 = vmor %vm1259, %vm1260
        %v1262 = vsel %vm1261, %v1254, %v1258
        %v1263 = vand.u32 2147483647, %v1244
        %vm1264 = vcmp.eq.f32.partialorder %v1263, 8.507059e+37
        %v1265 = vand.u32 %v1244, 2147483648
        %v1266 = vor.u32 1.1754944e-38, %v1265
        %v1267 = vsel %vm1264, %v1266, %v1262
        %v1268 = vmul.f32 %v1235, %v1267
        %v1269 = vrcp.pop %v1247
        %v1270 = vmul.f32 %v1247, %v1269
        %v1271 = vsub.f32 1.0, %v1270
        %v1272 = vmul.f32 %v1269, %v1271
        %v1273 = vadd.f32 %v1269, %v1272
        %vm1274 = vweird.f32 %v1247
        %vm1275 = vweird.f32 %v1269
        %vm1276 = vmor %vm1274, %vm1275
        %v1277 = vsel %vm1276, %v1269, %v1273
        %v1278 = vand.u32 2147483647, %v1247
        %vm1279 = vcmp.eq.f32.partialorder %v1278, 8.507059e+37
        %v1280 = vand.u32 %v1247, 2147483648
        %v1281 = vor.u32 1.1754944e-38, %v1280
        %v1282 = vsel %vm1279, %v1281, %v1277
        %v1283 = vmul.f32 %v1237, %v1282
        %v1284 = vrcp.pop %v1250
        %v1285 = vmul.f32 %v1250, %v1284
        %v1286 = vsub.f32 1.0, %v1285
        %v1287 = vmul.f32 %v1284, %v1286
        %v1288 = vadd.f32 %v1284, %v1287
        %vm1289 = vweird.f32 %v1250
        %vm1290 = vweird.f32 %v1284
        %vm1291 = vmor %vm1289, %vm1290
        %v1292 = vsel %vm1291, %v1284, %v1288
        %v1293 = vand.u32 2147483647, %v1250
        %vm1294 = vcmp.eq.f32.partialorder %v1293, 8.507059e+37
        %v1295 = vand.u32 %v1250, 2147483648
        %v1296 = vor.u32 1.1754944e-38, %v1295
        %v1297 = vsel %vm1294, %v1296, %v1292
        %v1298 = vmul.f32 %v1239, %v1297
        %v1299 = vrcp.pop %v1253
        %v1300 = vmul.f32 %v1253, %v1299
        %v1301 = vsub.f32 1.0, %v1300
        %v1302 = vmul.f32 %v1299, %v1301
        %v1303 = vadd.f32 %v1299, %v1302
        %vm1304 = vweird.f32 %v1253
        %vm1305 = vweird.f32 %v1299
        %vm1306 = vmor %vm1304, %vm1305
        %v1307 = vsel %vm1306, %v1299, %v1303
        %v1308 = vand.u32 2147483647, %v1253
        %vm1309 = vcmp.eq.f32.partialorder %v1308, 8.507059e+37
        %v1310 = vand.u32 %v1253, 2147483648
        %v1311 = vor.u32 1.1754944e-38, %v1310
        %v1312 = vsel %vm1309, %v1311, %v1307
        %v1313 = vmul.f32 %v1241, %v1312
        %v1314 = vpack.c.bf16 %v1268, %v1268
        %v1315 = vpack.c.bf16 %v1283, %v1283
        %v1316 = vpack.c.bf16 %v1298, %v1298
        %v1317 = vpack.c.bf16 %v1313, %v1313
        %1318 = vrot.lane.b32.xlu0 %v1124, 96
        %v1319 = vpop.permute.xlu0 %1318
        %v1322 = vsel %vm1217, %v1314, 0
        %1324 = vmatpush.bf16.msra.mxu0 0
        %1325 = vmatpush.bf16.msra.mxu0 0
        %1326 = vmatpush.bf16.msra.mxu0 0
        %1327 = vmatpush.bf16.msra.mxu0 0
        %1328 = vmatpush.bf16.msra.mxu0 0
        %1329 = vmatpush.bf16.msra.mxu0 0
        %1330 = vmatpush.bf16.msra.mxu0 0
        %1331 = vmatpush.bf16.msra.mxu0 %v1319
        %1332 = vmatmul.bf16.gmra.mxu0 %v1322
        %v1333 = vpop.f32.mrf.mxu0
        %v1334 = vadd.f32 0.0, %v1333
        %v1335 = vpop.f32.mrf.mxu0
        %1336 = vdwg.mxu0
        %1337 = vrot.lane.b32.xlu0 %v1149, 96
        %v1338 = vpop.permute.xlu0 %1337
        %v1341 = vsel %vm1217, %v1315, 0
        %1343 = vmatpush.bf16.msra.mxu0 0
        %1344 = vmatpush.bf16.msra.mxu0 0
        %1345 = vmatpush.bf16.msra.mxu0 0
        %1346 = vmatpush.bf16.msra.mxu0 0
        %1347 = vmatpush.bf16.msra.mxu0 0
        %1348 = vmatpush.bf16.msra.mxu0 0
        %1349 = vmatpush.bf16.msra.mxu0 0
        %1350 = vmatpush.bf16.msra.mxu0 %v1338
        %1351 = vmatmul.bf16.gmra.mxu0 %v1341
        %v1352 = vpop.f32.mrf.mxu0
        %v1353 = vadd.f32 0.0, %v1352
        %v1354 = vpop.f32.mrf.mxu0
        %1355 = vdwg.mxu0
        %1356 = vrot.lane.b32.xlu0 %v1173, 96
        %v1357 = vpop.permute.xlu0 %1356
        %v1360 = vsel %vm1217, %v1316, 0
        %1362 = vmatpush.bf16.msra.mxu0 0
        %1363 = vmatpush.bf16.msra.mxu0 0
        %1364 = vmatpush.bf16.msra.mxu0 0
        %1365 = vmatpush.bf16.msra.mxu0 0
        %1366 = vmatpush.bf16.msra.mxu0 0
        %1367 = vmatpush.bf16.msra.mxu0 0
        %1368 = vmatpush.bf16.msra.mxu0 0
        %1369 = vmatpush.bf16.msra.mxu0 %v1357
        %1370 = vmatmul.bf16.gmra.mxu0 %v1360
        %v1371 = vpop.f32.mrf.mxu0
        %v1372 = vadd.f32 0.0, %v1371
        %v1373 = vpop.f32.mrf.mxu0
        %1374 = vdwg.mxu0
        %1375 = vrot.lane.b32.xlu0 %v1197, 96
        %v1376 = vpop.permute.xlu0 %1375
        %v1379 = vsel %vm1217, %v1317, 0
        %1381 = vmatpush.bf16.msra.mxu0 0
        %1382 = vmatpush.bf16.msra.mxu0 0
        %1383 = vmatpush.bf16.msra.mxu0 0
        %1384 = vmatpush.bf16.msra.mxu0 0
        %1385 = vmatpush.bf16.msra.mxu0 0
        %1386 = vmatpush.bf16.msra.mxu0 0
        %1387 = vmatpush.bf16.msra.mxu0 0
        %1388 = vmatpush.bf16.msra.mxu0 %v1376
        %1389 = vmatmul.bf16.gmra.mxu0 %v1379
        %v1390 = vpop.f32.mrf.mxu0
        %v1391 = vadd.f32 0.0, %v1390
        %v1392 = vpop.f32.mrf.mxu0
        %1393 = vdwg.mxu0
        %1395 = vrot.lane.b32.xlu0 %v1353, 8
        %v1396 = vpop.permute.xlu0 %1395
        %1399 = vrot.lane.b32.xlu0 %v1372, 16
        %v1400 = vpop.permute.xlu0 %1399
        %1403 = vrot.lane.b32.xlu0 %v1391, 24
        %v1404 = vpop.permute.xlu0 %1403
        %v1406 = vsel %vm1125, %v1334, %v1396
        %v1407 = vsel %vm1217, %v1406, %v1400
        %vm1408 = vcmask 195584
        %v1409 = vsel %vm1408, %v1407, %v1404
        %v1410 = vpack.c.bf16 %v1409, %v1409
        %v1411 = vld [vmem:[%s803] sm:$0xf]
        %v1412 = vld [vmem:[%s803 + $0x4] sm:$0xf]
        %v1413 = vld [vmem:[%s803 + $0x8] sm:$0xf]
        %v1414 = vld [vmem:[%s803 + $0xc] sm:$0xf]
        %v1415 = vld [vmem:[%s972] sm:$0x1]
        %v1417 = vperm.slane %v1415, 0
        %v1423 = vunpack.c.l.b16 %v1411
        %v1424 = vunpack.c.l.b16 %v1412
        %v1425 = vunpack.c.l.b16 %v1413
        %v1426 = vunpack.c.l.b16 %v1414
        %v1427 = vpack.c.b16 %v1424, %v1423
        %v1428 = vpack.c.b16 %v1426, %v1425
        %v1432 = vsel %vm1022, %v1410, 0
        %1434 = vmatpush.bf16.msra.mxu0 0
        %1435 = vmatpush.bf16.msra.mxu0 0
        %1436 = vmatpush.bf16.msra.mxu0 0
        %1437 = vmatpush.bf16.msra.mxu0 0
        %1438 = vmatpush.bf16.msra.mxu0 0
        %1439 = vmatpush.bf16.msra.mxu0 0
        %1440 = vmatpush.bf16.msra.mxu0 %v1428
        %1441 = vmatpush.bf16.msra.mxu0 %v1427
        %1442 = vmatmul.bf16.gmra.mxu0 %v1432
        %v1443 = vpop.f32.mrf.mxu0
        %v1444 = vadd.f32 %v1417, %v1443
        %v1445 = vpop.f32.mrf.mxu0
        %1446 = vdwg.mxu0
        %v1447 = vadd.f32 %v998, %v1444
        %v1448 = vld [vmem:[%s986] sm:$0x1]
        %v1449 = vld [vmem:[%s822] sm:$0x1]
        %v1450 = vsel %vm1022, %v1447, 0.0
        %1451 = vadd.xlane.f32.xlu0 %v1450
        %v1452 = vpop.xlane.xlu0 %1451
        %v1453 = vrcp.pop 32.0
        %v1454 = vmul.f32 32.0, %v1453
        %v1455 = vsub.f32 1.0, %v1454
        %v1456 = vmul.f32 %v1453, %v1455
        %v1457 = vadd.f32 %v1453, %v1456
        %vm1458 = vweird.f32 %v1453
        %v1459 = vsel %vm1458, %v1453, %v1457
        %v1460 = vmul.f32 %v1452, %v1459
        %v1461 = vsub.f32 %v1447, %v1460
        %v1462 = vmul.f32 %v1461, %v1461
        %v1463 = vsel %vm1022, %v1462, 0.0
        %1464 = vadd.xlane.f32.xlu0 %v1463
        %v1465 = vpop.xlane.xlu0 %1464
        %v1466 = vmul.f32 %v1465, %v1459
        %v1467 = vadd.f32 %v1466, 1e-05
        %v1468 = vrsqrt.pop %v1467
        %v1469 = vmul.f32 %v1468, %v1467
        %v1470 = vmul.f32 %v1469, %v1468
        %v1471 = vmul.f32 0.5, %v1470
        %v1472 = vsub.f32 1.5, %v1471
        %v1473 = vmul.f32 %v1468, %v1472
        %vm1474 = vweird.f32 %v1467
        %vm1475 = vweird.f32 %v1468
        %vm1476 = vmor %vm1474, %vm1475
        %v1477 = vsel %vm1476, %v1468, %v1473
        %v1478 = vmul.f32 %v1461, %v1477
        %v1480 = vperm.slane %v1448, 0
        %v1482 = vmul.f32 %v1478, %v1480
        %v1484 = vperm.slane %v1449, 0
        %v1486 = vadd.f32 %v1482, %v1484
        %v1487 = vpack.c.bf16 %v1486, %v1486
        %v1488 = vld [vmem:[%s813] sm:$0xf]
        %v1489 = vld [vmem:[%s813 + $0x4] sm:$0xf]
        %v1490 = vld [vmem:[%s813 + $0x8] sm:$0xf]
        %v1491 = vld [vmem:[%s813 + $0xc] sm:$0xf]
        %v1492 = vld [vmem:[%s975] sm:$0x1]
        %v1494 = vperm.slane %v1492, 0
        %v1500 = vunpack.c.l.b16 %v1488
        %v1501 = vunpack.c.l.b16 %v1489
        %v1502 = vunpack.c.l.b16 %v1490
        %v1503 = vunpack.c.l.b16 %v1491
        %v1504 = vpack.c.b16 %v1501, %v1500
        %v1505 = vpack.c.b16 %v1503, %v1502
        %v1509 = vsel %vm1022, %v1487, 0
        %1511 = vmatpush.bf16.msra.mxu0 0
        %1512 = vmatpush.bf16.msra.mxu0 0
        %1513 = vmatpush.bf16.msra.mxu0 0
        %1514 = vmatpush.bf16.msra.mxu0 0
        %1515 = vmatpush.bf16.msra.mxu0 0
        %1516 = vmatpush.bf16.msra.mxu0 0
        %1517 = vmatpush.bf16.msra.mxu0 %v1505
        %1518 = vmatpush.bf16.msra.mxu0 %v1504
        %1519 = vmatmul.bf16.gmra.mxu0 %v1509
        %v1520 = vpop.f32.mrf.mxu0
        %v1521 = vadd.f32 %v1494, %v1520
        %v1522 = vpop.f32.mrf.mxu0
        %1523 = vdwg.mxu0
        %v1524 = vmax.f32 %v1521, 0.0
        %v1525 = vpack.c.bf16 %v1524, %v1524
        %v1526 = vld [vmem:[%s980] sm:$0xf]
        %v1527 = vld [vmem:[%s980 + $0x4] sm:$0xf]
        %v1528 = vld [vmem:[%s980 + $0x8] sm:$0xf]
        %v1529 = vld [vmem:[%s980 + $0xc] sm:$0xf]
        %v1530 = vld [vmem:[%s980 + $0x10] sm:$0xf]
        %v1531 = vld [vmem:[%s980 + $0x14] sm:$0xf]
        %v1532 = vld [vmem:[%s980 + $0x18] sm:$0xf]
        %v1533 = vld [vmem:[%s980 + $0x1c] sm:$0xf]
        %v1534 = vld [vmem:[%s983] sm:$0x1]
        %v1536 = vperm.slane %v1534, 0
        %v1546 = vunpack.c.l.b16 %v1526
        %v1547 = vunpack.c.l.b16 %v1527
        %v1548 = vunpack.c.l.b16 %v1528
        %v1549 = vunpack.c.l.b16 %v1529
        %v1550 = vunpack.c.l.b16 %v1530
        %v1551 = vunpack.c.l.b16 %v1531
        %v1552 = vunpack.c.l.b16 %v1532
        %v1553 = vunpack.c.l.b16 %v1533
        %v1554 = vpack.c.b16 %v1547, %v1546
        %v1555 = vpack.c.b16 %v1549, %v1548
        %v1556 = vpack.c.b16 %v1551, %v1550
        %v1557 = vpack.c.b16 %v1553, %v1552
        %vm1562 = vcmask 523264
        %v1564 = vsel %vm1562, %v1525, 0
        %1566 = vmatpush.bf16.msra.mxu0 0
        %1567 = vmatpush.bf16.msra.mxu0 0
        %1568 = vmatpush.bf16.msra.mxu0 0
        %1569 = vmatpush.bf16.msra.mxu0 0
        %1570 = vmatpush.bf16.msra.mxu0 %v1557
        %1571 = vmatpush.bf16.msra.mxu0 %v1556
        %1572 = vmatpush.bf16.msra.mxu0 %v1555
        %1573 = vmatpush.bf16.msra.mxu0 %v1554
        %1574 = vmatmul.bf16.gmra.mxu0 %v1564
        %v1575 = vpop.f32.mrf.mxu0
        %v1576 = vadd.f32 %v1536, %v1575
        %v1577 = vpop.f32.mrf.mxu0
        %1578 = vdwg.mxu0
        %v1579 = vadd.f32 %v1486, %v1576
        %v1580 = vld [vmem:[%s989] sm:$0x1]
        %v1581 = vld [vmem:[%s831] sm:$0x1]
        %v1582 = vsel %vm1022, %v1579, 0.0
        %1583 = vadd.xlane.f32.xlu0 %v1582
        %v1584 = vpop.xlane.xlu0 %1583
        %v1585 = vmul.f32 %v1584, %v1459
        %v1586 = vsub.f32 %v1579, %v1585
        %v1587 = vmul.f32 %v1586, %v1586
        %v1588 = vsel %vm1022, %v1587, 0.0
        %1589 = vadd.xlane.f32.xlu0 %v1588
        %v1590 = vpop.xlane.xlu0 %1589
        %v1591 = vmul.f32 %v1590, %v1459
        %v1592 = vadd.f32 %v1591, 1e-05
        %v1593 = vrsqrt.pop %v1592
        %v1594 = vmul.f32 %v1593, %v1592
        %v1595 = vmul.f32 %v1594, %v1593
        %v1596 = vmul.f32 0.5, %v1595
        %v1597 = vsub.f32 1.5, %v1596
        %v1598 = vmul.f32 %v1593, %v1597
        %vm1599 = vweird.f32 %v1592
        %vm1600 = vweird.f32 %v1593
        %vm1601 = vmor %vm1599, %vm1600
        %v1602 = vsel %vm1601, %v1593, %v1598
        %v1603 = vmul.f32 %v1586, %v1602
        %v1605 = vperm.slane %v1580, 0
        %v1607 = vmul.f32 %v1603, %v1605
        %v1609 = vperm.slane %v1581, 0
        %v1611 = vadd.f32 %v1607, %v1609
        %1612 = vst.msk [vmem:[#allocation2] sm:$0xff] %vm1022, %v1611
        %p1613 = scmp.eq.s32.totalorder %s54, 1
        // Predicated region
        $region121: #{tpu_custom_call.1} parent=91 // pred_check
          %p1614 = pneg %p1613
        $region122: #{tpu_custom_call.1} parent=91 // pred_check_branch
          %1616 = sbr.rel (%p1614) target = $region124
        $region123: #{tpu_custom_call.1} parent=91 // pred_region
          %v1617 = vld [vmem:[%s16] sm:$0x1]
          %v1618 = vld [vmem:[%s17] sm:$0x1]
          %v1619 = vsel %vm1022, %v1611, 0.0
          %1620 = vadd.xlane.f32.xlu0 %v1619
          %v1621 = vpop.xlane.xlu0 %1620
          %v1622 = vmul.f32 %v1621, %v1459
          %v1623 = vsub.f32 %v1611, %v1622
          %v1624 = vmul.f32 %v1623, %v1623
          %v1625 = vsel %vm1022, %v1624, 0.0
          %1626 = vadd.xlane.f32.xlu0 %v1625
          %v1627 = vpop.xlane.xlu0 %1626
          %v1628 = vmul.f32 %v1627, %v1459
          %v1629 = vadd.f32 %v1628, 1e-05
          %v1630 = vrsqrt.pop %v1629
          %v1631 = vmul.f32 %v1630, %v1629
          %v1632 = vmul.f32 %v1631, %v1630
          %v1633 = vmul.f32 0.5, %v1632
          %v1634 = vsub.f32 1.5, %v1633
          %v1635 = vmul.f32 %v1630, %v1634
          %vm1636 = vweird.f32 %v1629
          %vm1637 = vweird.f32 %v1630
          %vm1638 = vmor %vm1636, %vm1637
          %v1639 = vsel %vm1638, %v1630, %v1635
          %v1640 = vmul.f32 %v1623, %v1639
          %v1642 = vperm.slane %v1617, 0
          %v1644 = vmul.f32 %v1640, %v1642
          %v1646 = vperm.slane %v1618, 0
          %v1648 = vadd.f32 %v1644, %v1646
          %1649 = vst.msk [vmem:[%s944] sm:$0xff] %vm1022, %v1648
          %v1650 = vsel %vm1217, %v1268, 0.0
          %v1651 = vsel %vm1217, %v1283, 0.0
          %v1652 = vadd.f32 %v1650, %v1651
          %v1653 = vsel %vm1217, %v1298, 0.0
          %v1654 = vadd.f32 %v1652, %v1653
          %v1655 = vsel %vm1217, %v1313, 0.0
          %v1656 = vadd.f32 %v1654, %v1655
          %v1657 = vrcp.pop 4.0
          %v1658 = vmul.f32 4.0, %v1657
          %v1659 = vsub.f32 1.0, %v1658
          %v1660 = vmul.f32 %v1657, %v1659
          %v1661 = vadd.f32 %v1657, %v1660
          %vm1662 = vweird.f32 %v1657
          %v1663 = vsel %vm1662, %v1657, %v1661
          %v1664 = vmul.f32 %v1656, %v1663
          %1665 = vst.msk [vmem:[%s951] sm:$0xff] %vm1217, %v1664
        $region124: #{tpu_custom_call.1} parent=91 // pred_fallthru
          _
        %s1666 = sand.u32 %s527, 1
        %s1667 = scalar_lea.sflag [#allocation5], %s1666
        %s1668 = sand.u32 %s527, 1
        %s1669 = smul.addr %s1668, 8
        %s1670 = scalar_lea.vmem [#allocation14], %s1669
        %s1671 = sand.u32 %s553, 1
        %s1672 = scalar_lea.sflag [#allocation16], %s1671
        %s1673 = sand.u32 %s553, 1
        %s1674 = smul.addr %s1673, 8
        %s1675 = scalar_lea.vmem [#allocation15], %s1674
        // Predicated region
        $region125: #{tpu_custom_call.1} parent=91 // pred_check
          %p1676 = pneg %p537
        $region126: #{tpu_custom_call.1} parent=91 // pred_check_branch
          %1678 = sbr.rel (%p1676) target = $region128
        $region127: #{tpu_custom_call.1} parent=91 // pred_region
          %1680 = vsyncadd %s1667, 0
          %s1681 = smul.addr %s53, 8
          %s1682 = scalar_lea.hbm %s18, %s1681
          %s1684 = sshll.u32 %s1670, 4
          %s1685 = int_to_ptr.vmem [resolvable:$true] %s1684
          %s1686 = sshll.u32 %s1682, 4
          %s1687 = int_to_ptr.hbm [resolvable:$true] %s1686
          %1689 = dma.vmem_to_hbm [thread:$0]  %s1685, 128, %s1687, %s1667
        $region128: #{tpu_custom_call.1} parent=91 // pred_fallthru
          _
        // Predicated region
        $region129: #{tpu_custom_call.1} parent=91 // pred_check
          %p1690 = pneg %p563
        $region130: #{tpu_custom_call.1} parent=91 // pred_check_branch
          %1692 = sbr.rel (%p1690) target = $region132
        $region131: #{tpu_custom_call.1} parent=91 // pred_region
          %1694 = vsyncadd %s1672, 0
          %s1695 = smul.addr %s53, 8
          %s1696 = scalar_lea.hbm %s19, %s1695
          %s1698 = sshll.u32 %s1675, 4
          %s1699 = int_to_ptr.vmem [resolvable:$true] %s1698
          %s1700 = sshll.u32 %s1696, 4
          %s1701 = int_to_ptr.hbm [resolvable:$true] %s1700
          %1703 = dma.vmem_to_hbm [thread:$0]  %s1699, 128, %s1701, %s1672
        $region132: #{tpu_custom_call.1} parent=91 // pred_fallthru
          _
      $region92: #{tpu_custom_call.1} parent=5 // pred_fallthru
        _
      %p1704 = scmp.le.s32.totalorder 2, %s44
      // Predicated region
      $region133: #{tpu_custom_call.1} parent=5 // pred_check
        %p1705 = pneg %p1704
      $region134: #{tpu_custom_call.1} parent=5 // pred_check_branch
        %1707 = sbr.rel (%p1705) target = $region136
      $region135: #{tpu_custom_call.1} parent=5 // pred_region
        %s1708 = ssub.s32 %s44, 2
        // Predicated region
        $region137: #{tpu_custom_call.1} parent=135 // pred_check
          %p1709 = pneg %p543
        $region138: #{tpu_custom_call.1} parent=135 // pred_check_branch
          %1711 = sbr.rel (%p1709) target = $region140
        $region139: #{tpu_custom_call.1} parent=135 // pred_region
          %s1712 = sand.u32 %s528, 1
          %s1713 = scalar_lea.sflag [#allocation5], %s1712
          %s1714 = sand.u32 %s528, 1
          %s1715 = smul.addr %s1714, 8
          %s1716 = scalar_lea.vmem [#allocation14], %s1715
          %1718 = dma.done %s1713, 128
        $region140: #{tpu_custom_call.1} parent=135 // pred_fallthru
          _
        // Predicated region
        $region141: #{tpu_custom_call.1} parent=135 // pred_check
          %p1719 = pneg %p569
        $region142: #{tpu_custom_call.1} parent=135 // pred_check_branch
          %1721 = sbr.rel (%p1719) target = $region144
        $region143: #{tpu_custom_call.1} parent=135 // pred_region
          %s1722 = sand.u32 %s554, 1
          %s1723 = scalar_lea.sflag [#allocation16], %s1722
          %s1724 = sand.u32 %s554, 1
          %s1725 = smul.addr %s1724, 8
          %s1726 = scalar_lea.vmem [#allocation15], %s1725
          %1728 = dma.done %s1723, 128
        $region144: #{tpu_custom_call.1} parent=135 // pred_fallthru
          _
      $region136: #{tpu_custom_call.1} parent=5 // pred_fallthru
        _
    $region6: #{tpu_custom_call.1} parent=1 // loop_footer
      %s48 = sadd.s32 1, %s44
    $region7: #{tpu_custom_call.1} parent=1 // loop_footer_branch
      %43 = sbr.rel target = $region3
    $region8: #{tpu_custom_call.1} parent=1 // loop_exit
      _
    %1729 = vsyncpa [#allocation4], 1
    %s1730 = scalar_lea.sflag [#allocation4], 1
    %1731 = vsyncpa %s1730, 1
    %1732 = vsyncpa [#allocation7], 1
    %s1733 = scalar_lea.sflag [#allocation7], 1
    %1734 = vsyncpa %s1733, 1
    %1735 = vsyncpa [#allocation10], 1
    %s1736 = scalar_lea.sflag [#allocation10], 1
    %1737 = vsyncpa %s1736, 1
    %1738 = vsyncpa [#allocation13], 1
    %s1739 = scalar_lea.sflag [#allocation13], 1
    %1740 = vsyncpa %s1739, 1
    %1741 = vsyncpa [#allocation5], 1
    %s1742 = scalar_lea.sflag [#allocation5], 1
    %1743 = vsyncpa %s1742, 1
    %1744 = vsyncpa [#allocation16], 1
    %s1745 = scalar_lea.sflag [#allocation16], 1
    %1746 = vsyncpa %s1745, 1

</llo_original>
